<compile_context>
chip_gen: v5e
topology: v5e:2x2
jax: 0.10.0
libtpu: 0.0.40
codegen_flags: <defaults>
</compile_context>

<pallas_src>
import jax
import jax.numpy as jnp
from jax.experimental import pallas as pl
from jax.experimental.pallas import tpu as pltpu

# Geometry of the original LeNet `Net` (input 1x32x32).
H = W = 32
KS = 5
HO1 = WO1 = 28      # conv1 output
HP1 = WP1 = 14      # after pool1
HO2 = WO2 = 10      # conv2 output
HP2 = WP2 = 5       # after pool2
C1 = 8              # conv1 out-channels padded 6 -> 8 (lane packing)
C2 = 16             # conv2 out-channels (already 16)
NPAD = 128          # padded FC / output feature width (lane-dense stores)

_PACK_ORDER = ("w1t", "b1", "r1e", "r1o", "c1e", "c1o",
               "w2t", "b2", "r2e", "r2o", "c2e", "c2o",
               "wf1", "bf1", "wf2", "bf2", "wf3", "bf3")


# ----------------------------------------------------------------------------
# The fused Pallas kernel (one grid step == one batch element)
# ----------------------------------------------------------------------------
def _lenet_kernel(x_ref,
                  w1t, b1, r1e, r1o, c1e, c1o,
                  w2t, b2, r2e, r2o, c2e, c2o,
                  wf1, bf1, wf2, bf2, wf3, bf3,
                  o_ref):
    f32, bf16 = jnp.float32, jnp.bfloat16

    def mm(a, b):  # bf16 x bf16 MXU matmul with f32 accumulation
        return jnp.dot(a.astype(bf16), b.astype(bf16), preferred_element_type=f32)

    def pool(h, row_e, row_o, col_e, col_o):
        # 2x2 / stride-2 max pool: even/odd selection matmuls + elementwise max.
        hb = h.astype(bf16)
        rows = jnp.maximum(
            jnp.dot(row_e[...], hb, preferred_element_type=f32),
            jnp.dot(row_o[...], hb, preferred_element_type=f32))
        rb = rows.astype(bf16)
        return jnp.maximum(
            jnp.dot(rb, col_e[...], preferred_element_type=f32),
            jnp.dot(rb, col_o[...], preferred_element_type=f32))

    xb = x_ref[0]                                       # (32, 32) f32

    # conv1 + bias + relu: sum of 5 row-shifted matmuls against banded weights.
    acc = mm(xb[0:HO1, :], w1t[0])
    for di in range(1, KS):
        acc = acc + mm(xb[di:di + HO1, :], w1t[di])
    h1 = jnp.maximum(acc + b1[...], 0.0)                # (28, 28*C1)

    p1 = pool(h1, r1e, r1o, c1e, c1o)                   # (14, 14*C1)

    # conv2 + bias + relu
    acc = mm(p1[0:HO2, :], w2t[0])
    for di in range(1, KS):
        acc = acc + mm(p1[di:di + HO2, :], w2t[di])
    h2 = jnp.maximum(acc + b2[...], 0.0)                # (10, 10*C2)

    p2 = pool(h2, r2e, r2o, c2e, c2o)                   # (5, 5*C2)

    # fc1: contract over (pooled-row, width*channel) with 5 row-wise matmuls.
    accf = mm(p2[0:1, :], wf1[0])
    for i in range(1, HP2):
        accf = accf + mm(p2[i:i + 1, :], wf1[i])
    f1 = jnp.maximum(accf + bf1[...], 0.0)              # (1, 128)

    f2 = jnp.maximum(mm(f1, wf2[...]) + bf2[...], 0.0)  # (1, 128)
    f3 = mm(f2, wf3[...]) + bf3[...]                    # (1, 128), first 10 = logits

    o_ref[0] = f3.astype(o_ref.dtype)


# ----------------------------------------------------------------------------
# One-time weight repacking (PyTorch layout -> kernel-friendly operands)
# ----------------------------------------------------------------------------
def _row_select(n_out, phase, dtype):
    # (n_out, 2*n_out) 0/1 matrix with M[i, 2*i + phase] = 1.
    r = jnp.arange(n_out)[:, None]
    c = jnp.arange(2 * n_out)[None, :]
    return (c == 2 * r + phase).astype(dtype)


def _col_select(n_out_w, nch, phase, dtype):
    # (2*n_out_w*nch, n_out_w*nch) 0/1 matrix selecting width-group 2*j+phase,
    # identity over the (lane-fastest) channel index.
    r = jnp.arange(2 * n_out_w * nch)
    q = jnp.arange(n_out_w * nch)
    r_w, r_c = r // nch, r % nch
    q_w, q_c = q // nch, q % nch
    return ((r_c[:, None] == q_c[None, :]) &
            (r_w[:, None] == 2 * q_w[None, :] + phase)).astype(dtype)


def _conv_banded(wconv, cin_pad, cout_pad, w_in, w_out, dtype):
    # Banded ("Toeplitz") matrices, one per kernel row di:
    #   out[di][w*cin_pad + ci, j*cout_pad + co] = wconv[co, ci, di, w - j]
    # for 0 <= w - j < k, else 0.  Padded channels get zero weights.
    cout, cin, k, _ = wconv.shape
    dj = jnp.arange(w_in)[:, None] - jnp.arange(w_out)[None, :]       # (w_in, w_out)
    valid = (dj >= 0) & (dj < k)
    g = wconv[:, :, :, jnp.clip(dj, 0, k - 1)]                        # (co, ci, di, w, j)
    g = jnp.where(valid[None, None, None], g, 0.0)
    g = jnp.transpose(g, (2, 3, 1, 4, 0))                             # (di, w, ci, j, co)
    g = jnp.pad(g, ((0, 0), (0, 0), (0, cin_pad - cin),
                    (0, 0), (0, cout_pad - cout)))
    return g.reshape(k, w_in * cin_pad, w_out * cout_pad).astype(dtype)


def _bias_row(b, cpad, wrep):
    return jnp.tile(jnp.pad(b, (0, cpad - b.shape[0])), wrep)[None, :].astype(jnp.float32)


def prepare_params(params):
    """Repack PyTorch-layout parameters once; the forward pass then has no XLA
    layout work left (feedback: pre-transpose/pre-permute all weights)."""
    bf16 = jnp.bfloat16

    # fc1: permute columns from PyTorch's (c, h, w) flatten order into the kernel's
    # per-pooled-row (w, c) lane order; one (5*C2, 128) slab per pooled row h.
    lane = jnp.arange(WP2 * C2)
    c_of_l, w_of_l = lane % C2, lane // C2
    cols = (c_of_l[None, :] * (HP2 * WP2)
            + jnp.arange(HP2)[:, None] * WP2
            + w_of_l[None, :])                                        # (5, 80)
    wf1 = jnp.transpose(params["fc1_w"][:, cols], (1, 2, 0))          # (5, 80, 120)
    wf1 = jnp.pad(wf1, ((0, 0), (0, 0), (0, NPAD - 120)))

    wf2 = jnp.pad(params["fc2_w"].T, ((0, NPAD - 120), (0, NPAD - 84)))
    wf3 = jnp.pad(params["fc3_w"].T, ((0, NPAD - 84), (0, NPAD - 10)))

    return {
        "w1t": _conv_banded(params["conv1_w"], 1, C1, W, WO1, bf16),    # (5, 32, 224)
        "b1": _bias_row(params["conv1_b"], C1, WO1),                    # (1, 224)
        "r1e": _row_select(HP1, 0, bf16), "r1o": _row_select(HP1, 1, bf16),
        "c1e": _col_select(WP1, C1, 0, bf16), "c1o": _col_select(WP1, C1, 1, bf16),
        "w2t": _conv_banded(params["conv2_w"], C1, C2, WP1, WO2, bf16),  # (5, 112, 160)
        "b2": _bias_row(params["conv2_b"], C2, WO2),                    # (1, 160)
        "r2e": _row_select(HP2, 0, bf16), "r2o": _row_select(HP2, 1, bf16),
        "c2e": _col_select(WP2, C2, 0, bf16), "c2o": _col_select(WP2, C2, 1, bf16),
        "wf1": wf1.astype(bf16),
        "bf1": jnp.pad(params["fc1_b"], (0, NPAD - 120))[None, :].astype(jnp.float32),
        "wf2": wf2.astype(bf16),
        "bf2": jnp.pad(params["fc2_b"], (0, NPAD - 84))[None, :].astype(jnp.float32),
        "wf3": wf3.astype(bf16),
        "bf3": jnp.pad(params["fc3_b"], (0, NPAD - 10))[None, :].astype(jnp.float32),
    }


# ----------------------------------------------------------------------------
# Forward pass (single fused pallas_call)
# ----------------------------------------------------------------------------
def _const_spec(arr):
    zeros = (0,) * arr.ndim
    return pl.BlockSpec(arr.shape, lambda b, _z=zeros: _z)


def net_forward(packed, x):
    B = x.shape[0]
    x2 = x.reshape(B, H, W).astype(jnp.float32)          # NCHW with C=1 -> (B, H, W)
    weights = [packed[k] for k in _PACK_ORDER]
    out = pl.pallas_call(
        _lenet_kernel,
        out_shape=jax.ShapeDtypeStruct((B, 1, NPAD), jnp.float32),
        grid=(B,),
        in_specs=[pl.BlockSpec((1, H, W), lambda b: (b, 0, 0))]
                 + [_const_spec(wgt) for wgt in weights],
        out_specs=pl.BlockSpec((1, 1, NPAD), lambda b: (b, 0, 0)),
        compiler_params=pltpu.CompilerParams(
            dimension_semantics=("parallel",)),          # v7x: shard batch over 2 TCs
    )(x2, *weights)
    return out.reshape(B, NPAD)[:, :10]


# ----------------------------------------------------------------------------
# Parameters (deterministic, PyTorch-default-style uniform init)
# ----------------------------------------------------------------------------
def init_params(key):
    keys = jax.random.split(key, 10)

    def u(k, shape, fan_in):
        bound = 1.0 / float(fan_in) ** 0.5
        return jax.random.uniform(k, shape, jnp.float32, -bound, bound)

    return {
        "conv1_w": u(keys[0], (6, 1, 5, 5), 1 * 5 * 5),
        "conv1_b": u(keys[1], (6,), 1 * 5 * 5),
        "conv2_w": u(keys[2], (16, 6, 5, 5), 6 * 5 * 5),
        "conv2_b": u(keys[3], (16,), 6 * 5 * 5),
        "fc1_w":   u(keys[4], (120, 400), 400),
        "fc1_b":   u(keys[5], (120,), 400),
        "fc2_w":   u(keys[6], (84, 120), 120),
        "fc2_b":   u(keys[7], (84,), 120),
        "fc3_w":   u(keys[8], (10, 84), 84),
        "fc3_b":   u(keys[9], (10,), 84),
    }


# ----------------------------------------------------------------------------
# Pure-JAX reference (for a correctness tolerance check)
# ----------------------------------------------------------------------------
def _reference_forward(params, x):
    def conv(z, w, b):
        y = jax.lax.conv_general_dilated(
            z, w, window_strides=(1, 1), padding="VALID",
            dimension_numbers=("NCHW", "OIHW", "NCHW"))
        return jax.nn.relu(y + b[None, :, None, None])

    def pool(z):
        return jax.lax.reduce_window(z, -jnp.inf, jax.lax.max,
                                     (1, 1, 2, 2), (1, 1, 2, 2), "VALID")

    z = pool(conv(x, params["conv1_w"], params["conv1_b"]))
    z = pool(conv(z, params["conv2_w"], params["conv2_b"]))
    z = z.reshape(z.shape[0], -1)
    z = jax.nn.relu(z @ params["fc1_w"].T + params["fc1_b"])
    z = jax.nn.relu(z @ params["fc2_w"].T + params["fc2_b"])
    return z @ params["fc3_w"].T + params["fc3_b"]


if __name__ == "__main__":
    key = jax.random.PRNGKey(0)
    pkey, xkey = jax.random.split(key)
    params = init_params(pkey)
    packed = prepare_params(params)          # one-time weight repacking (outside jit)
    # LeNet geometry requires 32x32 single-channel input (16*5*5 = 400 flat).
    x = jax.random.normal(xkey, (2, 1, 32, 32), dtype=jnp.float32)

    fwd = jax.jit(net_forward)
    out = jax.block_until_ready(fwd(packed, x))
    assert out.shape == (2, 10), out.shape
    assert out.dtype == jnp.float32

    ref = jax.block_until_ready(_reference_forward(params, x))
    max_err = float(jnp.max(jnp.abs(out - ref)))
    assert max_err < 5e-2, f"mismatch vs reference: {max_err}"
    print("KERNEL_OK")
</pallas_src>

<mosaic_0001>
module attributes {stable_mosaic.version = 11 : i64} {
  func.func @_lenet_kernel(%arg0: i32, %arg1: memref<1x32x32xf32, #tpu.memory_space<vmem>>, %arg2: memref<5x32x224xbf16, #tpu.memory_space<vmem>>, %arg3: memref<1x224xf32, #tpu.memory_space<vmem>>, %arg4: memref<14x28xbf16, #tpu.memory_space<vmem>>, %arg5: memref<14x28xbf16, #tpu.memory_space<vmem>>, %arg6: memref<224x112xbf16, #tpu.memory_space<vmem>>, %arg7: memref<224x112xbf16, #tpu.memory_space<vmem>>, %arg8: memref<5x112x160xbf16, #tpu.memory_space<vmem>>, %arg9: memref<1x160xf32, #tpu.memory_space<vmem>>, %arg10: memref<5x10xbf16, #tpu.memory_space<vmem>>, %arg11: memref<5x10xbf16, #tpu.memory_space<vmem>>, %arg12: memref<160x80xbf16, #tpu.memory_space<vmem>>, %arg13: memref<160x80xbf16, #tpu.memory_space<vmem>>, %arg14: memref<5x80x128xbf16, #tpu.memory_space<vmem>>, %arg15: memref<1x128xf32, #tpu.memory_space<vmem>>, %arg16: memref<128x128xbf16, #tpu.memory_space<vmem>>, %arg17: memref<1x128xf32, #tpu.memory_space<vmem>>, %arg18: memref<128x128xbf16, #tpu.memory_space<vmem>>, %arg19: memref<1x128xf32, #tpu.memory_space<vmem>>, %arg20: memref<1x1x128xf32, #tpu.memory_space<vmem>>) attributes {dimension_semantics = [#tpu.dimension_semantics<parallel>], iteration_bounds = array<i64: 2>, scalar_prefetch = 0 : i64, scratch_operands = 0 : i64, tpu.core_type = #tpu.core_type<tc>, window_params = [{transform_indices = @transform_0, window_bounds = array<i64: 1, 32, 32>}, {pipeline_mode = #tpu.pipeline_mode<synchronous>, transform_indices = @transform_1, window_bounds = array<i64: 5, 32, 224>}, {pipeline_mode = #tpu.pipeline_mode<synchronous>, transform_indices = @transform_2, window_bounds = array<i64: 1, 224>}, {pipeline_mode = #tpu.pipeline_mode<synchronous>, transform_indices = @transform_3, window_bounds = array<i64: 14, 28>}, {pipeline_mode = #tpu.pipeline_mode<synchronous>, transform_indices = @transform_4, window_bounds = array<i64: 14, 28>}, {pipeline_mode = #tpu.pipeline_mode<synchronous>, transform_indices = @transform_5, window_bounds = array<i64: 224, 112>}, {pipeline_mode = #tpu.pipeline_mode<synchronous>, transform_indices = @transform_6, window_bounds = array<i64: 224, 112>}, {pipeline_mode = #tpu.pipeline_mode<synchronous>, transform_indices = @transform_7, window_bounds = array<i64: 5, 112, 160>}, {pipeline_mode = #tpu.pipeline_mode<synchronous>, transform_indices = @transform_8, window_bounds = array<i64: 1, 160>}, {pipeline_mode = #tpu.pipeline_mode<synchronous>, transform_indices = @transform_9, window_bounds = array<i64: 5, 10>}, {pipeline_mode = #tpu.pipeline_mode<synchronous>, transform_indices = @transform_10, window_bounds = array<i64: 5, 10>}, {pipeline_mode = #tpu.pipeline_mode<synchronous>, transform_indices = @transform_11, window_bounds = array<i64: 160, 80>}, {pipeline_mode = #tpu.pipeline_mode<synchronous>, transform_indices = @transform_12, window_bounds = array<i64: 160, 80>}, {pipeline_mode = #tpu.pipeline_mode<synchronous>, transform_indices = @transform_13, window_bounds = array<i64: 5, 80, 128>}, {pipeline_mode = #tpu.pipeline_mode<synchronous>, transform_indices = @transform_14, window_bounds = array<i64: 1, 128>}, {pipeline_mode = #tpu.pipeline_mode<synchronous>, transform_indices = @transform_15, window_bounds = array<i64: 128, 128>}, {pipeline_mode = #tpu.pipeline_mode<synchronous>, transform_indices = @transform_16, window_bounds = array<i64: 1, 128>}, {pipeline_mode = #tpu.pipeline_mode<synchronous>, transform_indices = @transform_17, window_bounds = array<i64: 128, 128>}, {pipeline_mode = #tpu.pipeline_mode<synchronous>, transform_indices = @transform_18, window_bounds = array<i64: 1, 128>}, {transform_indices = @transform_19, window_bounds = array<i64: 1, 1, 128>}]} {
    %c0 = arith.constant 0 : index
    %c0_0 = arith.constant 0 : index
    %c0_1 = arith.constant 0 : index
    %0 = vector.load %arg1[%c0, %c0_0, %c0_1] : memref<1x32x32xf32, #tpu.memory_space<vmem>>, vector<1x32x32xf32>
    %1 = vector.shape_cast %0 : vector<1x32x32xf32> to vector<32x32xf32>
    %2 = vector.extract_strided_slice %1 {offsets = [0, 0], sizes = [28, 32], strides = [1, 1]} : vector<32x32xf32> to vector<28x32xf32>
    %c0_2 = arith.constant 0 : index
    %c0_3 = arith.constant 0 : index
    %c0_4 = arith.constant 0 : index
    %3 = vector.load %arg2[%c0_2, %c0_3, %c0_4] : memref<5x32x224xbf16, #tpu.memory_space<vmem>>, vector<1x32x224xbf16>
    %4 = vector.shape_cast %3 : vector<1x32x224xbf16> to vector<32x224xbf16>
    %5 = arith.truncf %2 : vector<28x32xf32> to vector<28x32xbf16>
    %cst = arith.constant dense<0.000000e+00> : vector<28x224xf32>
    %6 = tpu.matmul %5, %4, %cst {dimension_numbers = #tpu.dot_dimension_numbers<[1], [0], [0], [1], [0, 0, 1, 1], [], []>} : vector<28x32xbf16>, vector<32x224xbf16>, vector<28x224xf32> -> vector<28x224xf32>
    %7 = vector.extract_strided_slice %1 {offsets = [1, 0], sizes = [28, 32], strides = [1, 1]} : vector<32x32xf32> to vector<28x32xf32>
    %c1 = arith.constant 1 : index
    %c0_5 = arith.constant 0 : index
    %c0_6 = arith.constant 0 : index
    %8 = vector.load %arg2[%c1, %c0_5, %c0_6] : memref<5x32x224xbf16, #tpu.memory_space<vmem>>, vector<1x32x224xbf16>
    %9 = vector.shape_cast %8 : vector<1x32x224xbf16> to vector<32x224xbf16>
    %10 = arith.truncf %7 : vector<28x32xf32> to vector<28x32xbf16>
    %cst_7 = arith.constant dense<0.000000e+00> : vector<28x224xf32>
    %11 = tpu.matmul %10, %9, %cst_7 {dimension_numbers = #tpu.dot_dimension_numbers<[1], [0], [0], [1], [0, 0, 1, 1], [], []>} : vector<28x32xbf16>, vector<32x224xbf16>, vector<28x224xf32> -> vector<28x224xf32>
    %12 = arith.addf %6, %11 : vector<28x224xf32>
    %13 = vector.extract_strided_slice %1 {offsets = [2, 0], sizes = [28, 32], strides = [1, 1]} : vector<32x32xf32> to vector<28x32xf32>
    %c2 = arith.constant 2 : index
    %c0_8 = arith.constant 0 : index
    %c0_9 = arith.constant 0 : index
    %14 = vector.load %arg2[%c2, %c0_8, %c0_9] : memref<5x32x224xbf16, #tpu.memory_space<vmem>>, vector<1x32x224xbf16>
    %15 = vector.shape_cast %14 : vector<1x32x224xbf16> to vector<32x224xbf16>
    %16 = arith.truncf %13 : vector<28x32xf32> to vector<28x32xbf16>
    %cst_10 = arith.constant dense<0.000000e+00> : vector<28x224xf32>
    %17 = tpu.matmul %16, %15, %cst_10 {dimension_numbers = #tpu.dot_dimension_numbers<[1], [0], [0], [1], [0, 0, 1, 1], [], []>} : vector<28x32xbf16>, vector<32x224xbf16>, vector<28x224xf32> -> vector<28x224xf32>
    %18 = arith.addf %12, %17 : vector<28x224xf32>
    %19 = vector.extract_strided_slice %1 {offsets = [3, 0], sizes = [28, 32], strides = [1, 1]} : vector<32x32xf32> to vector<28x32xf32>
    %c3 = arith.constant 3 : index
    %c0_11 = arith.constant 0 : index
    %c0_12 = arith.constant 0 : index
    %20 = vector.load %arg2[%c3, %c0_11, %c0_12] : memref<5x32x224xbf16, #tpu.memory_space<vmem>>, vector<1x32x224xbf16>
    %21 = vector.shape_cast %20 : vector<1x32x224xbf16> to vector<32x224xbf16>
    %22 = arith.truncf %19 : vector<28x32xf32> to vector<28x32xbf16>
    %cst_13 = arith.constant dense<0.000000e+00> : vector<28x224xf32>
    %23 = tpu.matmul %22, %21, %cst_13 {dimension_numbers = #tpu.dot_dimension_numbers<[1], [0], [0], [1], [0, 0, 1, 1], [], []>} : vector<28x32xbf16>, vector<32x224xbf16>, vector<28x224xf32> -> vector<28x224xf32>
    %24 = arith.addf %18, %23 : vector<28x224xf32>
    %25 = vector.extract_strided_slice %1 {offsets = [4, 0], sizes = [28, 32], strides = [1, 1]} : vector<32x32xf32> to vector<28x32xf32>
    %c4 = arith.constant 4 : index
    %c0_14 = arith.constant 0 : index
    %c0_15 = arith.constant 0 : index
    %26 = vector.load %arg2[%c4, %c0_14, %c0_15] : memref<5x32x224xbf16, #tpu.memory_space<vmem>>, vector<1x32x224xbf16>
    %27 = vector.shape_cast %26 : vector<1x32x224xbf16> to vector<32x224xbf16>
    %28 = arith.truncf %25 : vector<28x32xf32> to vector<28x32xbf16>
    %cst_16 = arith.constant dense<0.000000e+00> : vector<28x224xf32>
    %29 = tpu.matmul %28, %27, %cst_16 {dimension_numbers = #tpu.dot_dimension_numbers<[1], [0], [0], [1], [0, 0, 1, 1], [], []>} : vector<28x32xbf16>, vector<32x224xbf16>, vector<28x224xf32> -> vector<28x224xf32>
    %30 = arith.addf %24, %29 : vector<28x224xf32>
    %c0_17 = arith.constant 0 : index
    %c0_18 = arith.constant 0 : index
    %31 = vector.load %arg3[%c0_17, %c0_18] : memref<1x224xf32, #tpu.memory_space<vmem>>, vector<1x224xf32>
    %32 = vector.broadcast %31 : vector<1x224xf32> to vector<28x224xf32>
    %33 = arith.addf %30, %32 : vector<28x224xf32>
    %cst_19 = arith.constant 0.000000e+00 : f32
    %34 = vector.broadcast %cst_19 : f32 to vector<28x224xf32>
    %35 = arith.maximumf %33, %34 : vector<28x224xf32>
    %36 = arith.truncf %35 : vector<28x224xf32> to vector<28x224xbf16>
    %c0_20 = arith.constant 0 : index
    %c0_21 = arith.constant 0 : index
    %37 = vector.load %arg4[%c0_20, %c0_21] : memref<14x28xbf16, #tpu.memory_space<vmem>>, vector<14x28xbf16>
    %cst_22 = arith.constant dense<0.000000e+00> : vector<14x224xf32>
    %38 = tpu.matmul %37, %36, %cst_22 {dimension_numbers = #tpu.dot_dimension_numbers<[1], [0], [0], [1], [0, 0, 1, 1], [], []>} : vector<14x28xbf16>, vector<28x224xbf16>, vector<14x224xf32> -> vector<14x224xf32>
    %c0_23 = arith.constant 0 : index
    %c0_24 = arith.constant 0 : index
    %39 = vector.load %arg5[%c0_23, %c0_24] : memref<14x28xbf16, #tpu.memory_space<vmem>>, vector<14x28xbf16>
    %cst_25 = arith.constant dense<0.000000e+00> : vector<14x224xf32>
    %40 = tpu.matmul %39, %36, %cst_25 {dimension_numbers = #tpu.dot_dimension_numbers<[1], [0], [0], [1], [0, 0, 1, 1], [], []>} : vector<14x28xbf16>, vector<28x224xbf16>, vector<14x224xf32> -> vector<14x224xf32>
    %41 = arith.maximumf %38, %40 : vector<14x224xf32>
    %42 = arith.truncf %41 : vector<14x224xf32> to vector<14x224xbf16>
    %c0_26 = arith.constant 0 : index
    %c0_27 = arith.constant 0 : index
    %43 = vector.load %arg6[%c0_26, %c0_27] : memref<224x112xbf16, #tpu.memory_space<vmem>>, vector<224x112xbf16>
    %cst_28 = arith.constant dense<0.000000e+00> : vector<14x112xf32>
    %44 = tpu.matmul %42, %43, %cst_28 {dimension_numbers = #tpu.dot_dimension_numbers<[1], [0], [0], [1], [0, 0, 1, 1], [], []>} : vector<14x224xbf16>, vector<224x112xbf16>, vector<14x112xf32> -> vector<14x112xf32>
    %c0_29 = arith.constant 0 : index
    %c0_30 = arith.constant 0 : index
    %45 = vector.load %arg7[%c0_29, %c0_30] : memref<224x112xbf16, #tpu.memory_space<vmem>>, vector<224x112xbf16>
    %cst_31 = arith.constant dense<0.000000e+00> : vector<14x112xf32>
    %46 = tpu.matmul %42, %45, %cst_31 {dimension_numbers = #tpu.dot_dimension_numbers<[1], [0], [0], [1], [0, 0, 1, 1], [], []>} : vector<14x224xbf16>, vector<224x112xbf16>, vector<14x112xf32> -> vector<14x112xf32>
    %47 = arith.maximumf %44, %46 : vector<14x112xf32>
    %48 = vector.extract_strided_slice %47 {offsets = [0, 0], sizes = [10, 112], strides = [1, 1]} : vector<14x112xf32> to vector<10x112xf32>
    %c0_32 = arith.constant 0 : index
    %c0_33 = arith.constant 0 : index
    %c0_34 = arith.constant 0 : index
    %49 = vector.load %arg8[%c0_32, %c0_33, %c0_34] : memref<5x112x160xbf16, #tpu.memory_space<vmem>>, vector<1x112x160xbf16>
    %50 = vector.shape_cast %49 : vector<1x112x160xbf16> to vector<112x160xbf16>
    %51 = arith.truncf %48 : vector<10x112xf32> to vector<10x112xbf16>
    %cst_35 = arith.constant dense<0.000000e+00> : vector<10x160xf32>
    %52 = tpu.matmul %51, %50, %cst_35 {dimension_numbers = #tpu.dot_dimension_numbers<[1], [0], [0], [1], [0, 0, 1, 1], [], []>} : vector<10x112xbf16>, vector<112x160xbf16>, vector<10x160xf32> -> vector<10x160xf32>
    %53 = vector.extract_strided_slice %47 {offsets = [1, 0], sizes = [10, 112], strides = [1, 1]} : vector<14x112xf32> to vector<10x112xf32>
    %c1_36 = arith.constant 1 : index
    %c0_37 = arith.constant 0 : index
    %c0_38 = arith.constant 0 : index
    %54 = vector.load %arg8[%c1_36, %c0_37, %c0_38] : memref<5x112x160xbf16, #tpu.memory_space<vmem>>, vector<1x112x160xbf16>
    %55 = vector.shape_cast %54 : vector<1x112x160xbf16> to vector<112x160xbf16>
    %56 = arith.truncf %53 : vector<10x112xf32> to vector<10x112xbf16>
    %cst_39 = arith.constant dense<0.000000e+00> : vector<10x160xf32>
    %57 = tpu.matmul %56, %55, %cst_39 {dimension_numbers = #tpu.dot_dimension_numbers<[1], [0], [0], [1], [0, 0, 1, 1], [], []>} : vector<10x112xbf16>, vector<112x160xbf16>, vector<10x160xf32> -> vector<10x160xf32>
    %58 = arith.addf %52, %57 : vector<10x160xf32>
    %59 = vector.extract_strided_slice %47 {offsets = [2, 0], sizes = [10, 112], strides = [1, 1]} : vector<14x112xf32> to vector<10x112xf32>
    %c2_40 = arith.constant 2 : index
    %c0_41 = arith.constant 0 : index
    %c0_42 = arith.constant 0 : index
    %60 = vector.load %arg8[%c2_40, %c0_41, %c0_42] : memref<5x112x160xbf16, #tpu.memory_space<vmem>>, vector<1x112x160xbf16>
    %61 = vector.shape_cast %60 : vector<1x112x160xbf16> to vector<112x160xbf16>
    %62 = arith.truncf %59 : vector<10x112xf32> to vector<10x112xbf16>
    %cst_43 = arith.constant dense<0.000000e+00> : vector<10x160xf32>
    %63 = tpu.matmul %62, %61, %cst_43 {dimension_numbers = #tpu.dot_dimension_numbers<[1], [0], [0], [1], [0, 0, 1, 1], [], []>} : vector<10x112xbf16>, vector<112x160xbf16>, vector<10x160xf32> -> vector<10x160xf32>
    %64 = arith.addf %58, %63 : vector<10x160xf32>
    %65 = vector.extract_strided_slice %47 {offsets = [3, 0], sizes = [10, 112], strides = [1, 1]} : vector<14x112xf32> to vector<10x112xf32>
    %c3_44 = arith.constant 3 : index
    %c0_45 = arith.constant 0 : index
    %c0_46 = arith.constant 0 : index
    %66 = vector.load %arg8[%c3_44, %c0_45, %c0_46] : memref<5x112x160xbf16, #tpu.memory_space<vmem>>, vector<1x112x160xbf16>
    %67 = vector.shape_cast %66 : vector<1x112x160xbf16> to vector<112x160xbf16>
    %68 = arith.truncf %65 : vector<10x112xf32> to vector<10x112xbf16>
    %cst_47 = arith.constant dense<0.000000e+00> : vector<10x160xf32>
    %69 = tpu.matmul %68, %67, %cst_47 {dimension_numbers = #tpu.dot_dimension_numbers<[1], [0], [0], [1], [0, 0, 1, 1], [], []>} : vector<10x112xbf16>, vector<112x160xbf16>, vector<10x160xf32> -> vector<10x160xf32>
    %70 = arith.addf %64, %69 : vector<10x160xf32>
    %71 = vector.extract_strided_slice %47 {offsets = [4, 0], sizes = [10, 112], strides = [1, 1]} : vector<14x112xf32> to vector<10x112xf32>
    %c4_48 = arith.constant 4 : index
    %c0_49 = arith.constant 0 : index
    %c0_50 = arith.constant 0 : index
    %72 = vector.load %arg8[%c4_48, %c0_49, %c0_50] : memref<5x112x160xbf16, #tpu.memory_space<vmem>>, vector<1x112x160xbf16>
    %73 = vector.shape_cast %72 : vector<1x112x160xbf16> to vector<112x160xbf16>
    %74 = arith.truncf %71 : vector<10x112xf32> to vector<10x112xbf16>
    %cst_51 = arith.constant dense<0.000000e+00> : vector<10x160xf32>
    %75 = tpu.matmul %74, %73, %cst_51 {dimension_numbers = #tpu.dot_dimension_numbers<[1], [0], [0], [1], [0, 0, 1, 1], [], []>} : vector<10x112xbf16>, vector<112x160xbf16>, vector<10x160xf32> -> vector<10x160xf32>
    %76 = arith.addf %70, %75 : vector<10x160xf32>
    %c0_52 = arith.constant 0 : index
    %c0_53 = arith.constant 0 : index
    %77 = vector.load %arg9[%c0_52, %c0_53] : memref<1x160xf32, #tpu.memory_space<vmem>>, vector<1x160xf32>
    %78 = vector.broadcast %77 : vector<1x160xf32> to vector<10x160xf32>
    %79 = arith.addf %76, %78 : vector<10x160xf32>
    %cst_54 = arith.constant 0.000000e+00 : f32
    %80 = vector.broadcast %cst_54 : f32 to vector<10x160xf32>
    %81 = arith.maximumf %79, %80 : vector<10x160xf32>
    %82 = arith.truncf %81 : vector<10x160xf32> to vector<10x160xbf16>
    %c0_55 = arith.constant 0 : index
    %c0_56 = arith.constant 0 : index
    %83 = vector.load %arg10[%c0_55, %c0_56] : memref<5x10xbf16, #tpu.memory_space<vmem>>, vector<5x10xbf16>
    %cst_57 = arith.constant dense<0.000000e+00> : vector<5x160xf32>
    %84 = tpu.matmul %83, %82, %cst_57 {dimension_numbers = #tpu.dot_dimension_numbers<[1], [0], [0], [1], [0, 0, 1, 1], [], []>} : vector<5x10xbf16>, vector<10x160xbf16>, vector<5x160xf32> -> vector<5x160xf32>
    %c0_58 = arith.constant 0 : index
    %c0_59 = arith.constant 0 : index
    %85 = vector.load %arg11[%c0_58, %c0_59] : memref<5x10xbf16, #tpu.memory_space<vmem>>, vector<5x10xbf16>
    %cst_60 = arith.constant dense<0.000000e+00> : vector<5x160xf32>
    %86 = tpu.matmul %85, %82, %cst_60 {dimension_numbers = #tpu.dot_dimension_numbers<[1], [0], [0], [1], [0, 0, 1, 1], [], []>} : vector<5x10xbf16>, vector<10x160xbf16>, vector<5x160xf32> -> vector<5x160xf32>
    %87 = arith.maximumf %84, %86 : vector<5x160xf32>
    %88 = arith.truncf %87 : vector<5x160xf32> to vector<5x160xbf16>
    %c0_61 = arith.constant 0 : index
    %c0_62 = arith.constant 0 : index
    %89 = vector.load %arg12[%c0_61, %c0_62] : memref<160x80xbf16, #tpu.memory_space<vmem>>, vector<160x80xbf16>
    %cst_63 = arith.constant dense<0.000000e+00> : vector<5x80xf32>
    %90 = tpu.matmul %88, %89, %cst_63 {dimension_numbers = #tpu.dot_dimension_numbers<[1], [0], [0], [1], [0, 0, 1, 1], [], []>} : vector<5x160xbf16>, vector<160x80xbf16>, vector<5x80xf32> -> vector<5x80xf32>
    %c0_64 = arith.constant 0 : index
    %c0_65 = arith.constant 0 : index
    %91 = vector.load %arg13[%c0_64, %c0_65] : memref<160x80xbf16, #tpu.memory_space<vmem>>, vector<160x80xbf16>
    %cst_66 = arith.constant dense<0.000000e+00> : vector<5x80xf32>
    %92 = tpu.matmul %88, %91, %cst_66 {dimension_numbers = #tpu.dot_dimension_numbers<[1], [0], [0], [1], [0, 0, 1, 1], [], []>} : vector<5x160xbf16>, vector<160x80xbf16>, vector<5x80xf32> -> vector<5x80xf32>
    %93 = arith.maximumf %90, %92 : vector<5x80xf32>
    %94 = vector.extract_strided_slice %93 {offsets = [0, 0], sizes = [1, 80], strides = [1, 1]} : vector<5x80xf32> to vector<1x80xf32>
    %c0_67 = arith.constant 0 : index
    %c0_68 = arith.constant 0 : index
    %c0_69 = arith.constant 0 : index
    %95 = vector.load %arg14[%c0_67, %c0_68, %c0_69] : memref<5x80x128xbf16, #tpu.memory_space<vmem>>, vector<1x80x128xbf16>
    %96 = vector.shape_cast %95 : vector<1x80x128xbf16> to vector<80x128xbf16>
    %97 = arith.truncf %94 : vector<1x80xf32> to vector<1x80xbf16>
    %cst_70 = arith.constant dense<0.000000e+00> : vector<1x128xf32>
    %98 = tpu.matmul %97, %96, %cst_70 {dimension_numbers = #tpu.dot_dimension_numbers<[1], [0], [0], [1], [0, 0, 1, 1], [], []>} : vector<1x80xbf16>, vector<80x128xbf16>, vector<1x128xf32> -> vector<1x128xf32>
    %99 = vector.extract_strided_slice %93 {offsets = [1, 0], sizes = [1, 80], strides = [1, 1]} : vector<5x80xf32> to vector<1x80xf32>
    %c1_71 = arith.constant 1 : index
    %c0_72 = arith.constant 0 : index
    %c0_73 = arith.constant 0 : index
    %100 = vector.load %arg14[%c1_71, %c0_72, %c0_73] : memref<5x80x128xbf16, #tpu.memory_space<vmem>>, vector<1x80x128xbf16>
    %101 = vector.shape_cast %100 : vector<1x80x128xbf16> to vector<80x128xbf16>
    %102 = arith.truncf %99 : vector<1x80xf32> to vector<1x80xbf16>
    %cst_74 = arith.constant dense<0.000000e+00> : vector<1x128xf32>
    %103 = tpu.matmul %102, %101, %cst_74 {dimension_numbers = #tpu.dot_dimension_numbers<[1], [0], [0], [1], [0, 0, 1, 1], [], []>} : vector<1x80xbf16>, vector<80x128xbf16>, vector<1x128xf32> -> vector<1x128xf32>
    %104 = arith.addf %98, %103 : vector<1x128xf32>
    %105 = vector.extract_strided_slice %93 {offsets = [2, 0], sizes = [1, 80], strides = [1, 1]} : vector<5x80xf32> to vector<1x80xf32>
    %c2_75 = arith.constant 2 : index
    %c0_76 = arith.constant 0 : index
    %c0_77 = arith.constant 0 : index
    %106 = vector.load %arg14[%c2_75, %c0_76, %c0_77] : memref<5x80x128xbf16, #tpu.memory_space<vmem>>, vector<1x80x128xbf16>
    %107 = vector.shape_cast %106 : vector<1x80x128xbf16> to vector<80x128xbf16>
    %108 = arith.truncf %105 : vector<1x80xf32> to vector<1x80xbf16>
    %cst_78 = arith.constant dense<0.000000e+00> : vector<1x128xf32>
    %109 = tpu.matmul %108, %107, %cst_78 {dimension_numbers = #tpu.dot_dimension_numbers<[1], [0], [0], [1], [0, 0, 1, 1], [], []>} : vector<1x80xbf16>, vector<80x128xbf16>, vector<1x128xf32> -> vector<1x128xf32>
    %110 = arith.addf %104, %109 : vector<1x128xf32>
    %111 = vector.extract_strided_slice %93 {offsets = [3, 0], sizes = [1, 80], strides = [1, 1]} : vector<5x80xf32> to vector<1x80xf32>
    %c3_79 = arith.constant 3 : index
    %c0_80 = arith.constant 0 : index
    %c0_81 = arith.constant 0 : index
    %112 = vector.load %arg14[%c3_79, %c0_80, %c0_81] : memref<5x80x128xbf16, #tpu.memory_space<vmem>>, vector<1x80x128xbf16>
    %113 = vector.shape_cast %112 : vector<1x80x128xbf16> to vector<80x128xbf16>
    %114 = arith.truncf %111 : vector<1x80xf32> to vector<1x80xbf16>
    %cst_82 = arith.constant dense<0.000000e+00> : vector<1x128xf32>
    %115 = tpu.matmul %114, %113, %cst_82 {dimension_numbers = #tpu.dot_dimension_numbers<[1], [0], [0], [1], [0, 0, 1, 1], [], []>} : vector<1x80xbf16>, vector<80x128xbf16>, vector<1x128xf32> -> vector<1x128xf32>
    %116 = arith.addf %110, %115 : vector<1x128xf32>
    %117 = vector.extract_strided_slice %93 {offsets = [4, 0], sizes = [1, 80], strides = [1, 1]} : vector<5x80xf32> to vector<1x80xf32>
    %c4_83 = arith.constant 4 : index
    %c0_84 = arith.constant 0 : index
    %c0_85 = arith.constant 0 : index
    %118 = vector.load %arg14[%c4_83, %c0_84, %c0_85] : memref<5x80x128xbf16, #tpu.memory_space<vmem>>, vector<1x80x128xbf16>
    %119 = vector.shape_cast %118 : vector<1x80x128xbf16> to vector<80x128xbf16>
    %120 = arith.truncf %117 : vector<1x80xf32> to vector<1x80xbf16>
    %cst_86 = arith.constant dense<0.000000e+00> : vector<1x128xf32>
    %121 = tpu.matmul %120, %119, %cst_86 {dimension_numbers = #tpu.dot_dimension_numbers<[1], [0], [0], [1], [0, 0, 1, 1], [], []>} : vector<1x80xbf16>, vector<80x128xbf16>, vector<1x128xf32> -> vector<1x128xf32>
    %122 = arith.addf %116, %121 : vector<1x128xf32>
    %c0_87 = arith.constant 0 : index
    %c0_88 = arith.constant 0 : index
    %123 = vector.load %arg15[%c0_87, %c0_88] : memref<1x128xf32, #tpu.memory_space<vmem>>, vector<1x128xf32>
    %124 = arith.addf %122, %123 : vector<1x128xf32>
    %cst_89 = arith.constant 0.000000e+00 : f32
    %125 = vector.broadcast %cst_89 : f32 to vector<1x128xf32>
    %126 = arith.maximumf %124, %125 : vector<1x128xf32>
    %c0_90 = arith.constant 0 : index
    %c0_91 = arith.constant 0 : index
    %127 = vector.load %arg16[%c0_90, %c0_91] : memref<128x128xbf16, #tpu.memory_space<vmem>>, vector<128x128xbf16>
    %128 = arith.truncf %126 : vector<1x128xf32> to vector<1x128xbf16>
    %cst_92 = arith.constant dense<0.000000e+00> : vector<1x128xf32>
    %129 = tpu.matmul %128, %127, %cst_92 {dimension_numbers = #tpu.dot_dimension_numbers<[1], [0], [0], [1], [0, 0, 1, 1], [], []>} : vector<1x128xbf16>, vector<128x128xbf16>, vector<1x128xf32> -> vector<1x128xf32>
    %c0_93 = arith.constant 0 : index
    %c0_94 = arith.constant 0 : index
    %130 = vector.load %arg17[%c0_93, %c0_94] : memref<1x128xf32, #tpu.memory_space<vmem>>, vector<1x128xf32>
    %131 = arith.addf %129, %130 : vector<1x128xf32>
    %cst_95 = arith.constant 0.000000e+00 : f32
    %132 = vector.broadcast %cst_95 : f32 to vector<1x128xf32>
    %133 = arith.maximumf %131, %132 : vector<1x128xf32>
    %c0_96 = arith.constant 0 : index
    %c0_97 = arith.constant 0 : index
    %134 = vector.load %arg18[%c0_96, %c0_97] : memref<128x128xbf16, #tpu.memory_space<vmem>>, vector<128x128xbf16>
    %135 = arith.truncf %133 : vector<1x128xf32> to vector<1x128xbf16>
    %cst_98 = arith.constant dense<0.000000e+00> : vector<1x128xf32>
    %136 = tpu.matmul %135, %134, %cst_98 {dimension_numbers = #tpu.dot_dimension_numbers<[1], [0], [0], [1], [0, 0, 1, 1], [], []>} : vector<1x128xbf16>, vector<128x128xbf16>, vector<1x128xf32> -> vector<1x128xf32>
    %c0_99 = arith.constant 0 : index
    %c0_100 = arith.constant 0 : index
    %137 = vector.load %arg19[%c0_99, %c0_100] : memref<1x128xf32, #tpu.memory_space<vmem>>, vector<1x128xf32>
    %138 = arith.addf %136, %137 : vector<1x128xf32>
    %c0_101 = arith.constant 0 : index
    %c0_102 = arith.constant 0 : index
    %c0_103 = arith.constant 0 : index
    %139 = vector.load %arg20[%c0_101, %c0_102, %c0_103] : memref<1x1x128xf32, #tpu.memory_space<vmem>>, vector<1x1x128xf32>
    %140 = vector.shape_cast %139 : vector<1x1x128xf32> to vector<1x128xf32>
    %141 = vector.shape_cast %138 : vector<1x128xf32> to vector<1x1x128xf32>
    tpu.vector_store %arg20[%c0_101, %c0_102, %c0_103], %141 {strides = array<i32>} : memref<1x1x128xf32, #tpu.memory_space<vmem>>, vector<1x1x128xf32>,
    return
  }
  func.func @transform_0(%arg0: i32) -> (i32, i32, i32) {
    %c0_i32 = arith.constant 0 : i32
    %c0_i32_0 = arith.constant 0 : i32
    %c0_i32_1 = arith.constant 0 : i32
    return %arg0, %c0_i32, %c0_i32_0 : i32, i32, i32
  }
  func.func @transform_1(%arg0: i32) -> (i32, i32, i32) {
    %c0_i32 = arith.constant 0 : i32
    %c0_i32_0 = arith.constant 0 : i32
    %c0_i32_1 = arith.constant 0 : i32
    %c0_i32_2 = arith.constant 0 : i32
    return %c0_i32, %c0_i32_0, %c0_i32_1 : i32, i32, i32
  }
  func.func @transform_2(%arg0: i32) -> (i32, i32) {
    %c0_i32 = arith.constant 0 : i32
    %c0_i32_0 = arith.constant 0 : i32
    %c0_i32_1 = arith.constant 0 : i32
    return %c0_i32, %c0_i32_0 : i32, i32
  }
  func.func @transform_3(%arg0: i32) -> (i32, i32) {
    %c0_i32 = arith.constant 0 : i32
    %c0_i32_0 = arith.constant 0 : i32
    %c0_i32_1 = arith.constant 0 : i32
    return %c0_i32, %c0_i32_0 : i32, i32
  }
  func.func @transform_4(%arg0: i32) -> (i32, i32) {
    %c0_i32 = arith.constant 0 : i32
    %c0_i32_0 = arith.constant 0 : i32
    %c0_i32_1 = arith.constant 0 : i32
    return %c0_i32, %c0_i32_0 : i32, i32
  }
  func.func @transform_5(%arg0: i32) -> (i32, i32) {
    %c0_i32 = arith.constant 0 : i32
    %c0_i32_0 = arith.constant 0 : i32
    %c0_i32_1 = arith.constant 0 : i32
    return %c0_i32, %c0_i32_0 : i32, i32
  }
  func.func @transform_6(%arg0: i32) -> (i32, i32) {
    %c0_i32 = arith.constant 0 : i32
    %c0_i32_0 = arith.constant 0 : i32
    %c0_i32_1 = arith.constant 0 : i32
    return %c0_i32, %c0_i32_0 : i32, i32
  }
  func.func @transform_7(%arg0: i32) -> (i32, i32, i32) {
    %c0_i32 = arith.constant 0 : i32
    %c0_i32_0 = arith.constant 0 : i32
    %c0_i32_1 = arith.constant 0 : i32
    %c0_i32_2 = arith.constant 0 : i32
    return %c0_i32, %c0_i32_0, %c0_i32_1 : i32, i32, i32
  }
  func.func @transform_8(%arg0: i32) -> (i32, i32) {
    %c0_i32 = arith.constant 0 : i32
    %c0_i32_0 = arith.constant 0 : i32
    %c0_i32_1 = arith.constant 0 : i32
    return %c0_i32, %c0_i32_0 : i32, i32
  }
  func.func @transform_9(%arg0: i32) -> (i32, i32) {
    %c0_i32 = arith.constant 0 : i32
    %c0_i32_0 = arith.constant 0 : i32
    %c0_i32_1 = arith.constant 0 : i32
    return %c0_i32, %c0_i32_0 : i32, i32
  }
  func.func @transform_10(%arg0: i32) -> (i32, i32) {
    %c0_i32 = arith.constant 0 : i32
    %c0_i32_0 = arith.constant 0 : i32
    %c0_i32_1 = arith.constant 0 : i32
    return %c0_i32, %c0_i32_0 : i32, i32
  }
  func.func @transform_11(%arg0: i32) -> (i32, i32) {
    %c0_i32 = arith.constant 0 : i32
    %c0_i32_0 = arith.constant 0 : i32
    %c0_i32_1 = arith.constant 0 : i32
    return %c0_i32, %c0_i32_0 : i32, i32
  }
  func.func @transform_12(%arg0: i32) -> (i32, i32) {
    %c0_i32 = arith.constant 0 : i32
    %c0_i32_0 = arith.constant 0 : i32
    %c0_i32_1 = arith.constant 0 : i32
    return %c0_i32, %c0_i32_0 : i32, i32
  }
  func.func @transform_13(%arg0: i32) -> (i32, i32, i32) {
    %c0_i32 = arith.constant 0 : i32
    %c0_i32_0 = arith.constant 0 : i32
    %c0_i32_1 = arith.constant 0 : i32
    %c0_i32_2 = arith.constant 0 : i32
    return %c0_i32, %c0_i32_0, %c0_i32_1 : i32, i32, i32
  }
  func.func @transform_14(%arg0: i32) -> (i32, i32) {
    %c0_i32 = arith.constant 0 : i32
    %c0_i32_0 = arith.constant 0 : i32
    %c0_i32_1 = arith.constant 0 : i32
    return %c0_i32, %c0_i32_0 : i32, i32
  }
  func.func @transform_15(%arg0: i32) -> (i32, i32) {
    %c0_i32 = arith.constant 0 : i32
    %c0_i32_0 = arith.constant 0 : i32
    %c0_i32_1 = arith.constant 0 : i32
    return %c0_i32, %c0_i32_0 : i32, i32
  }
  func.func @transform_16(%arg0: i32) -> (i32, i32) {
    %c0_i32 = arith.constant 0 : i32
    %c0_i32_0 = arith.constant 0 : i32
    %c0_i32_1 = arith.constant 0 : i32
    return %c0_i32, %c0_i32_0 : i32, i32
  }
  func.func @transform_17(%arg0: i32) -> (i32, i32) {
    %c0_i32 = arith.constant 0 : i32
    %c0_i32_0 = arith.constant 0 : i32
    %c0_i32_1 = arith.constant 0 : i32
    return %c0_i32, %c0_i32_0 : i32, i32
  }
  func.func @transform_18(%arg0: i32) -> (i32, i32) {
    %c0_i32 = arith.constant 0 : i32
    %c0_i32_0 = arith.constant 0 : i32
    %c0_i32_1 = arith.constant 0 : i32
    return %c0_i32, %c0_i32_0 : i32, i32
  }
  func.func @transform_19(%arg0: i32) -> (i32, i32, i32) {
    %c0_i32 = arith.constant 0 : i32
    %c0_i32_0 = arith.constant 0 : i32
    %c0_i32_1 = arith.constant 0 : i32
    return %arg0, %c0_i32, %c0_i32_0 : i32, i32, i32
  }
}

</mosaic_0001>

<llo_original>
// kernel: net_forward.1
$region0: #{net_forward.1}
  #allocation0 [shape = 'u32[]', space=smem, size = 0x4, offset = 0x4, fixed_abs, tag = 'smem constant byte address 0x4 - core index']
  #allocation1 [shape = 'u32[72,128]{1,0:T(1,128)}', space=vmem, size = 0x9000, scoped, tag = 'internal scratch']
  %s0 = inlined_call_operand.vmem [shape: f32[2,32,32], index: 0, kind: input, shape index: {}]
  %s1 = inlined_call_operand.vmem [shape: bf16[5,32,224], index: 1, kind: input, shape index: {}]
  %s2 = inlined_call_operand.hbm [shape: f32[1,224], index: 2, kind: input, shape index: {}]
  %s3 = inlined_call_operand.vmem [shape: bf16[14,28], index: 3, kind: input, shape index: {}]
  %s4 = inlined_call_operand.vmem [shape: bf16[14,28], index: 4, kind: input, shape index: {}]
  %s5 = inlined_call_operand.vmem [shape: bf16[224,112], index: 5, kind: input, shape index: {}]
  %s6 = inlined_call_operand.vmem [shape: bf16[224,112], index: 6, kind: input, shape index: {}]
  %s7 = inlined_call_operand.vmem [shape: bf16[5,112,160], index: 7, kind: input, shape index: {}]
  %s8 = inlined_call_operand.hbm [shape: f32[1,160], index: 8, kind: input, shape index: {}]
  %s9 = inlined_call_operand.vmem [shape: bf16[5,10], index: 9, kind: input, shape index: {}]
  %s10 = inlined_call_operand.vmem [shape: bf16[5,10], index: 10, kind: input, shape index: {}]
  %s11 = inlined_call_operand.vmem [shape: bf16[160,80], index: 11, kind: input, shape index: {}]
  %s12 = inlined_call_operand.vmem [shape: bf16[160,80], index: 12, kind: input, shape index: {}]
  %s13 = inlined_call_operand.vmem [shape: bf16[5,80,128], index: 13, kind: input, shape index: {}]
  %s14 = inlined_call_operand.hbm [shape: f32[1,128], index: 14, kind: input, shape index: {}]
  %s15 = inlined_call_operand.vmem [shape: bf16[128,128], index: 15, kind: input, shape index: {}]
  %s16 = inlined_call_operand.hbm [shape: f32[1,128], index: 16, kind: input, shape index: {}]
  %s17 = inlined_call_operand.vmem [shape: bf16[128,128], index: 17, kind: input, shape index: {}]
  %s18 = inlined_call_operand.hbm [shape: f32[1,128], index: 18, kind: input, shape index: {}]
  %s19 = inlined_call_operand.hbm [shape: f32[2,1,128], index: 19, kind: output, shape index: {}]
  %s20 = sld [smem:[#allocation0]]
  $region129: #{net_forward.1} parent=0
    _
  %s22 = ssub.s32 1, %s20
  %s23 = scalar_select 0, %s22, %s20
  $region1: #{net_forward.1} parent=0
    #allocation2 [shape = 'u8[1024]{0}', space=vmem, size = 0x400, scoped, tag = 'input window, operand 2, single buffered']
    #allocation3 [shape = 's32[2]{0}', space=sflag, size = 0x8, scoped, tag = 'scoped memory for net_forward.1']
    #allocation4 [shape = 's32[2]{0}', space=sflag, size = 0x8, scoped, tag = 'scoped memory for net_forward.1']
    #allocation5 [shape = 'u8[1024]{0}', space=vmem, size = 0x400, scoped, tag = 'input window, operand 8, single buffered']
    #allocation6 [shape = 's32[1]{0}', space=sflag, size = 0x4, scoped, tag = 'scoped memory for net_forward.1']
    #allocation7 [shape = 'u8[512]{0}', space=vmem, size = 0x400, scoped, tag = 'input window, operand 14, single buffered']
    #allocation8 [shape = 'u8[512]{0}', space=vmem, size = 0x400, scoped, tag = 'input window, operand 16, single buffered']
    #allocation9 [shape = 's32[1]{0}', space=sflag, size = 0x4, scoped, tag = 'scoped memory for net_forward.1']
    #allocation10 [shape = 'u8[512]{0}', space=vmem, size = 0x400, scoped, tag = 'input window, operand 18, single buffered']
    #allocation11 [shape = 'u8[1024]{0}', space=vmem, size = 0x400, scoped, tag = 'output window, operand 0']
    %24 = vsyncpa [#allocation3], 0
    %25 = vsyncpa [#allocation6], 0
    %26 = vsyncpa [#allocation9], 0
    %27 = vsyncpa [#allocation4], 0
    %s28 = scalar_lea.sflag [#allocation4], 1
    %29 = vsyncpa %s28, 0
    loop: start=0, step=1, limit=4
    $region2: #{net_forward.1} parent=1 // loop_pre_header
      _
    $region3: #{net_forward.1} parent=1 // loop_header
      %s31 = sphi 0, %s35
      %p32 = scmp.ge.s32.totalorder %s31, 4
      %s41 = sphi 0, %s43
      %s44 = sphi 0, %s41
      %s45 = sphi 0, %s44
      %s61 = sphi 0, %s45
      %s65 = sphi 0, %s65
      %s67 = sphi 0, %s65
      %s68 = sphi 0, %s67
      %s82 = sphi 0, %s68
      %s86 = sphi 0, %s86
      %s88 = sphi 0, %s86
      %s89 = sphi 0, %s88
      %s103 = sphi 0, %s89
      %s107 = sphi 0, %s107
      %s109 = sphi 0, %s107
      %s110 = sphi 0, %s109
      %s124 = sphi 0, %s110
      %s128 = sphi 0, %s128
      %s130 = sphi 0, %s128
      %s131 = sphi 0, %s130
      %s145 = sphi 0, %s131
      %s149 = sphi 0, %s149
      %s151 = sphi 0, %s149
      %s152 = sphi 0, %s151
      %s166 = sphi 0, %s152
      %s170 = sphi 0, %s170
      %s172 = sphi 0, %s170
      %s173 = sphi 0, %s172
      %s187 = sphi 0, %s173
      %s191 = sphi 0, %s191
      %s193 = sphi 0, %s191
      %s194 = sphi 0, %s193
      %s208 = sphi 0, %s194
      %s212 = sphi 0, %s212
      %s214 = sphi 0, %s212
      %s215 = sphi 0, %s214
      %s229 = sphi 0, %s215
      %s233 = sphi 0, %s233
      %s235 = sphi 0, %s233
      %s236 = sphi 0, %s235
      %s250 = sphi 0, %s236
      %s254 = sphi 0, %s254
      %s256 = sphi 0, %s254
      %s257 = sphi 0, %s256
      %s271 = sphi 0, %s257
      %s275 = sphi 0, %s275
      %s277 = sphi 0, %s275
      %s278 = sphi 0, %s277
      %s292 = sphi 0, %s278
      %s296 = sphi 0, %s296
      %s298 = sphi 0, %s296
      %s299 = sphi 0, %s298
      %s313 = sphi 0, %s299
      %s317 = sphi 0, %s317
      %s319 = sphi 0, %s317
      %s320 = sphi 0, %s319
      %s334 = sphi 0, %s320
      %s338 = sphi 0, %s338
      %s340 = sphi 0, %s338
      %s341 = sphi 0, %s340
      %s355 = sphi 0, %s341
      %s359 = sphi 0, %s359
      %s361 = sphi 0, %s359
      %s362 = sphi 0, %s361
      %s376 = sphi 0, %s362
      %s380 = sphi 0, %s380
      %s382 = sphi 0, %s380
      %s383 = sphi 0, %s382
      %s397 = sphi 0, %s383
      %s401 = sphi 0, %s401
      %s403 = sphi 0, %s401
      %s404 = sphi 0, %s403
      %s418 = sphi 0, %s404
      %s422 = sphi 0, %s422
      %s424 = sphi 0, %s422
      %s425 = sphi 0, %s424
      %s439 = sphi 0, %s425
      %s445 = sphi 0, %s447
      %s448 = sphi 0, %s445
      %s449 = sphi 0, %s448
      %s465 = sphi 0, %s449
    $region4: #{net_forward.1} parent=1 // loop_header_branch
      %34 = sbr.rel (%p32) target = $region8
    $region5: #{net_forward.1} parent=1 // loop_body
      %s36 = ssub.s32 %s31, 1
      %s37 = ssub.s32 %s31, 2
      %s38 = sadd.s32 %s31, 1
      %s39 = ssub.s32 %s31, %s38
      %p40 = scmp.eq.s32.totalorder %s39, 0
      %s42 = sadd.s32 %s41, 1
      %s43 = scalar_select %p40, %s41, %s42
      %p46 = pneg %p40
      %p47 = scmp.eq.s32.totalorder %s31, 1
      %p48 = por %p46, %p47
      %p49 = scmp.ne.s32.totalorder %s41, %s44
      %p50 = scmp.eq.s32.totalorder %s31, 0
      %p51 = por %p49, %p50
      %p52 = scmp.ne.s32.totalorder %s41, %s44
      %p53 = scmp.eq.s32.totalorder %s36, 1
      %p54 = por %p52, %p53
      %p55 = scmp.ne.s32.totalorder %s44, %s45
      %p56 = scmp.eq.s32.totalorder %s36, 0
      %p57 = por %p55, %p56
      %p58 = scmp.ne.s32.totalorder %s44, %s45
      %p59 = scmp.eq.s32.totalorder %s37, 1
      %p60 = por %p58, %p59
      %p62 = scmp.ne.s32.totalorder %s45, %s61
      %p63 = scmp.eq.s32.totalorder %s37, 0
      %p64 = por %p62, %p63
      %s66 = sadd.s32 %s65, 1
      %p69 = scmp.eq.s32.totalorder %s31, 1
      %p70 = scmp.ne.s32.totalorder %s65, %s67
      %p71 = scmp.eq.s32.totalorder %s31, 0
      %p72 = por %p70, %p71
      %p73 = scmp.ne.s32.totalorder %s65, %s67
      %p74 = scmp.eq.s32.totalorder %s36, 1
      %p75 = por %p73, %p74
      %p76 = scmp.ne.s32.totalorder %s67, %s68
      %p77 = scmp.eq.s32.totalorder %s36, 0
      %p78 = por %p76, %p77
      %p79 = scmp.ne.s32.totalorder %s67, %s68
      %p80 = scmp.eq.s32.totalorder %s37, 1
      %p81 = por %p79, %p80
      %p83 = scmp.ne.s32.totalorder %s68, %s82
      %p84 = scmp.eq.s32.totalorder %s37, 0
      %p85 = por %p83, %p84
      %s87 = sadd.s32 %s86, 1
      %p90 = scmp.eq.s32.totalorder %s31, 1
      %p91 = scmp.ne.s32.totalorder %s86, %s88
      %p92 = scmp.eq.s32.totalorder %s31, 0
      %p93 = por %p91, %p92
      %p94 = scmp.ne.s32.totalorder %s86, %s88
      %p95 = scmp.eq.s32.totalorder %s36, 1
      %p96 = por %p94, %p95
      %p97 = scmp.ne.s32.totalorder %s88, %s89
      %p98 = scmp.eq.s32.totalorder %s36, 0
      %p99 = por %p97, %p98
      %p100 = scmp.ne.s32.totalorder %s88, %s89
      %p101 = scmp.eq.s32.totalorder %s37, 1
      %p102 = por %p100, %p101
      %p104 = scmp.ne.s32.totalorder %s89, %s103
      %p105 = scmp.eq.s32.totalorder %s37, 0
      %p106 = por %p104, %p105
      %s108 = sadd.s32 %s107, 1
      %p111 = scmp.eq.s32.totalorder %s31, 1
      %p112 = scmp.ne.s32.totalorder %s107, %s109
      %p113 = scmp.eq.s32.totalorder %s31, 0
      %p114 = por %p112, %p113
      %p115 = scmp.ne.s32.totalorder %s107, %s109
      %p116 = scmp.eq.s32.totalorder %s36, 1
      %p117 = por %p115, %p116
      %p118 = scmp.ne.s32.totalorder %s109, %s110
      %p119 = scmp.eq.s32.totalorder %s36, 0
      %p120 = por %p118, %p119
      %p121 = scmp.ne.s32.totalorder %s109, %s110
      %p122 = scmp.eq.s32.totalorder %s37, 1
      %p123 = por %p121, %p122
      %p125 = scmp.ne.s32.totalorder %s110, %s124
      %p126 = scmp.eq.s32.totalorder %s37, 0
      %p127 = por %p125, %p126
      %s129 = sadd.s32 %s128, 1
      %p132 = scmp.eq.s32.totalorder %s31, 1
      %p133 = scmp.ne.s32.totalorder %s128, %s130
      %p134 = scmp.eq.s32.totalorder %s31, 0
      %p135 = por %p133, %p134
      %p136 = scmp.ne.s32.totalorder %s128, %s130
      %p137 = scmp.eq.s32.totalorder %s36, 1
      %p138 = por %p136, %p137
      %p139 = scmp.ne.s32.totalorder %s130, %s131
      %p140 = scmp.eq.s32.totalorder %s36, 0
      %p141 = por %p139, %p140
      %p142 = scmp.ne.s32.totalorder %s130, %s131
      %p143 = scmp.eq.s32.totalorder %s37, 1
      %p144 = por %p142, %p143
      %p146 = scmp.ne.s32.totalorder %s131, %s145
      %p147 = scmp.eq.s32.totalorder %s37, 0
      %p148 = por %p146, %p147
      %s150 = sadd.s32 %s149, 1
      %p153 = scmp.eq.s32.totalorder %s31, 1
      %p154 = scmp.ne.s32.totalorder %s149, %s151
      %p155 = scmp.eq.s32.totalorder %s31, 0
      %p156 = por %p154, %p155
      %p157 = scmp.ne.s32.totalorder %s149, %s151
      %p158 = scmp.eq.s32.totalorder %s36, 1
      %p159 = por %p157, %p158
      %p160 = scmp.ne.s32.totalorder %s151, %s152
      %p161 = scmp.eq.s32.totalorder %s36, 0
      %p162 = por %p160, %p161
      %p163 = scmp.ne.s32.totalorder %s151, %s152
      %p164 = scmp.eq.s32.totalorder %s37, 1
      %p165 = por %p163, %p164
      %p167 = scmp.ne.s32.totalorder %s152, %s166
      %p168 = scmp.eq.s32.totalorder %s37, 0
      %p169 = por %p167, %p168
      %s171 = sadd.s32 %s170, 1
      %p174 = scmp.eq.s32.totalorder %s31, 1
      %p175 = scmp.ne.s32.totalorder %s170, %s172
      %p176 = scmp.eq.s32.totalorder %s31, 0
      %p177 = por %p175, %p176
      %p178 = scmp.ne.s32.totalorder %s170, %s172
      %p179 = scmp.eq.s32.totalorder %s36, 1
      %p180 = por %p178, %p179
      %p181 = scmp.ne.s32.totalorder %s172, %s173
      %p182 = scmp.eq.s32.totalorder %s36, 0
      %p183 = por %p181, %p182
      %p184 = scmp.ne.s32.totalorder %s172, %s173
      %p185 = scmp.eq.s32.totalorder %s37, 1
      %p186 = por %p184, %p185
      %p188 = scmp.ne.s32.totalorder %s173, %s187
      %p189 = scmp.eq.s32.totalorder %s37, 0
      %p190 = por %p188, %p189
      %s192 = sadd.s32 %s191, 1
      %p195 = scmp.eq.s32.totalorder %s31, 1
      %p196 = scmp.ne.s32.totalorder %s191, %s193
      %p197 = scmp.eq.s32.totalorder %s31, 0
      %p198 = por %p196, %p197
      %p199 = scmp.ne.s32.totalorder %s191, %s193
      %p200 = scmp.eq.s32.totalorder %s36, 1
      %p201 = por %p199, %p200
      %p202 = scmp.ne.s32.totalorder %s193, %s194
      %p203 = scmp.eq.s32.totalorder %s36, 0
      %p204 = por %p202, %p203
      %p205 = scmp.ne.s32.totalorder %s193, %s194
      %p206 = scmp.eq.s32.totalorder %s37, 1
      %p207 = por %p205, %p206
      %p209 = scmp.ne.s32.totalorder %s194, %s208
      %p210 = scmp.eq.s32.totalorder %s37, 0
      %p211 = por %p209, %p210
      %s213 = sadd.s32 %s212, 1
      %p216 = scmp.eq.s32.totalorder %s31, 1
      %p217 = scmp.ne.s32.totalorder %s212, %s214
      %p218 = scmp.eq.s32.totalorder %s31, 0
      %p219 = por %p217, %p218
      %p220 = scmp.ne.s32.totalorder %s212, %s214
      %p221 = scmp.eq.s32.totalorder %s36, 1
      %p222 = por %p220, %p221
      %p223 = scmp.ne.s32.totalorder %s214, %s215
      %p224 = scmp.eq.s32.totalorder %s36, 0
      %p225 = por %p223, %p224
      %p226 = scmp.ne.s32.totalorder %s214, %s215
      %p227 = scmp.eq.s32.totalorder %s37, 1
      %p228 = por %p226, %p227
      %p230 = scmp.ne.s32.totalorder %s215, %s229
      %p231 = scmp.eq.s32.totalorder %s37, 0
      %p232 = por %p230, %p231
      %s234 = sadd.s32 %s233, 1
      %p237 = scmp.eq.s32.totalorder %s31, 1
      %p238 = scmp.ne.s32.totalorder %s233, %s235
      %p239 = scmp.eq.s32.totalorder %s31, 0
      %p240 = por %p238, %p239
      %p241 = scmp.ne.s32.totalorder %s233, %s235
      %p242 = scmp.eq.s32.totalorder %s36, 1
      %p243 = por %p241, %p242
      %p244 = scmp.ne.s32.totalorder %s235, %s236
      %p245 = scmp.eq.s32.totalorder %s36, 0
      %p246 = por %p244, %p245
      %p247 = scmp.ne.s32.totalorder %s235, %s236
      %p248 = scmp.eq.s32.totalorder %s37, 1
      %p249 = por %p247, %p248
      %p251 = scmp.ne.s32.totalorder %s236, %s250
      %p252 = scmp.eq.s32.totalorder %s37, 0
      %p253 = por %p251, %p252
      %s255 = sadd.s32 %s254, 1
      %p258 = scmp.eq.s32.totalorder %s31, 1
      %p259 = scmp.ne.s32.totalorder %s254, %s256
      %p260 = scmp.eq.s32.totalorder %s31, 0
      %p261 = por %p259, %p260
      %p262 = scmp.ne.s32.totalorder %s254, %s256
      %p263 = scmp.eq.s32.totalorder %s36, 1
      %p264 = por %p262, %p263
      %p265 = scmp.ne.s32.totalorder %s256, %s257
      %p266 = scmp.eq.s32.totalorder %s36, 0
      %p267 = por %p265, %p266
      %p268 = scmp.ne.s32.totalorder %s256, %s257
      %p269 = scmp.eq.s32.totalorder %s37, 1
      %p270 = por %p268, %p269
      %p272 = scmp.ne.s32.totalorder %s257, %s271
      %p273 = scmp.eq.s32.totalorder %s37, 0
      %p274 = por %p272, %p273
      %s276 = sadd.s32 %s275, 1
      %p279 = scmp.eq.s32.totalorder %s31, 1
      %p280 = scmp.ne.s32.totalorder %s275, %s277
      %p281 = scmp.eq.s32.totalorder %s31, 0
      %p282 = por %p280, %p281
      %p283 = scmp.ne.s32.totalorder %s275, %s277
      %p284 = scmp.eq.s32.totalorder %s36, 1
      %p285 = por %p283, %p284
      %p286 = scmp.ne.s32.totalorder %s277, %s278
      %p287 = scmp.eq.s32.totalorder %s36, 0
      %p288 = por %p286, %p287
      %p289 = scmp.ne.s32.totalorder %s277, %s278
      %p290 = scmp.eq.s32.totalorder %s37, 1
      %p291 = por %p289, %p290
      %p293 = scmp.ne.s32.totalorder %s278, %s292
      %p294 = scmp.eq.s32.totalorder %s37, 0
      %p295 = por %p293, %p294
      %s297 = sadd.s32 %s296, 1
      %p300 = scmp.eq.s32.totalorder %s31, 1
      %p301 = scmp.ne.s32.totalorder %s296, %s298
      %p302 = scmp.eq.s32.totalorder %s31, 0
      %p303 = por %p301, %p302
      %p304 = scmp.ne.s32.totalorder %s296, %s298
      %p305 = scmp.eq.s32.totalorder %s36, 1
      %p306 = por %p304, %p305
      %p307 = scmp.ne.s32.totalorder %s298, %s299
      %p308 = scmp.eq.s32.totalorder %s36, 0
      %p309 = por %p307, %p308
      %p310 = scmp.ne.s32.totalorder %s298, %s299
      %p311 = scmp.eq.s32.totalorder %s37, 1
      %p312 = por %p310, %p311
      %p314 = scmp.ne.s32.totalorder %s299, %s313
      %p315 = scmp.eq.s32.totalorder %s37, 0
      %p316 = por %p314, %p315
      %s318 = sadd.s32 %s317, 1
      %p321 = scmp.eq.s32.totalorder %s31, 1
      %p322 = scmp.ne.s32.totalorder %s317, %s319
      %p323 = scmp.eq.s32.totalorder %s31, 0
      %p324 = por %p322, %p323
      %p325 = scmp.ne.s32.totalorder %s317, %s319
      %p326 = scmp.eq.s32.totalorder %s36, 1
      %p327 = por %p325, %p326
      %p328 = scmp.ne.s32.totalorder %s319, %s320
      %p329 = scmp.eq.s32.totalorder %s36, 0
      %p330 = por %p328, %p329
      %p331 = scmp.ne.s32.totalorder %s319, %s320
      %p332 = scmp.eq.s32.totalorder %s37, 1
      %p333 = por %p331, %p332
      %p335 = scmp.ne.s32.totalorder %s320, %s334
      %p336 = scmp.eq.s32.totalorder %s37, 0
      %p337 = por %p335, %p336
      %s339 = sadd.s32 %s338, 1
      %p342 = scmp.eq.s32.totalorder %s31, 1
      %p343 = scmp.ne.s32.totalorder %s338, %s340
      %p344 = scmp.eq.s32.totalorder %s31, 0
      %p345 = por %p343, %p344
      %p346 = scmp.ne.s32.totalorder %s338, %s340
      %p347 = scmp.eq.s32.totalorder %s36, 1
      %p348 = por %p346, %p347
      %p349 = scmp.ne.s32.totalorder %s340, %s341
      %p350 = scmp.eq.s32.totalorder %s36, 0
      %p351 = por %p349, %p350
      %p352 = scmp.ne.s32.totalorder %s340, %s341
      %p353 = scmp.eq.s32.totalorder %s37, 1
      %p354 = por %p352, %p353
      %p356 = scmp.ne.s32.totalorder %s341, %s355
      %p357 = scmp.eq.s32.totalorder %s37, 0
      %p358 = por %p356, %p357
      %s360 = sadd.s32 %s359, 1
      %p363 = scmp.eq.s32.totalorder %s31, 1
      %p364 = scmp.ne.s32.totalorder %s359, %s361
      %p365 = scmp.eq.s32.totalorder %s31, 0
      %p366 = por %p364, %p365
      %p367 = scmp.ne.s32.totalorder %s359, %s361
      %p368 = scmp.eq.s32.totalorder %s36, 1
      %p369 = por %p367, %p368
      %p370 = scmp.ne.s32.totalorder %s361, %s362
      %p371 = scmp.eq.s32.totalorder %s36, 0
      %p372 = por %p370, %p371
      %p373 = scmp.ne.s32.totalorder %s361, %s362
      %p374 = scmp.eq.s32.totalorder %s37, 1
      %p375 = por %p373, %p374
      %p377 = scmp.ne.s32.totalorder %s362, %s376
      %p378 = scmp.eq.s32.totalorder %s37, 0
      %p379 = por %p377, %p378
      %s381 = sadd.s32 %s380, 1
      %p384 = scmp.eq.s32.totalorder %s31, 1
      %p385 = scmp.ne.s32.totalorder %s380, %s382
      %p386 = scmp.eq.s32.totalorder %s31, 0
      %p387 = por %p385, %p386
      %p388 = scmp.ne.s32.totalorder %s380, %s382
      %p389 = scmp.eq.s32.totalorder %s36, 1
      %p390 = por %p388, %p389
      %p391 = scmp.ne.s32.totalorder %s382, %s383
      %p392 = scmp.eq.s32.totalorder %s36, 0
      %p393 = por %p391, %p392
      %p394 = scmp.ne.s32.totalorder %s382, %s383
      %p395 = scmp.eq.s32.totalorder %s37, 1
      %p396 = por %p394, %p395
      %p398 = scmp.ne.s32.totalorder %s383, %s397
      %p399 = scmp.eq.s32.totalorder %s37, 0
      %p400 = por %p398, %p399
      %s402 = sadd.s32 %s401, 1
      %p405 = scmp.eq.s32.totalorder %s31, 1
      %p406 = scmp.ne.s32.totalorder %s401, %s403
      %p407 = scmp.eq.s32.totalorder %s31, 0
      %p408 = por %p406, %p407
      %p409 = scmp.ne.s32.totalorder %s401, %s403
      %p410 = scmp.eq.s32.totalorder %s36, 1
      %p411 = por %p409, %p410
      %p412 = scmp.ne.s32.totalorder %s403, %s404
      %p413 = scmp.eq.s32.totalorder %s36, 0
      %p414 = por %p412, %p413
      %p415 = scmp.ne.s32.totalorder %s403, %s404
      %p416 = scmp.eq.s32.totalorder %s37, 1
      %p417 = por %p415, %p416
      %p419 = scmp.ne.s32.totalorder %s404, %s418
      %p420 = scmp.eq.s32.totalorder %s37, 0
      %p421 = por %p419, %p420
      %s423 = sadd.s32 %s422, 1
      %p426 = scmp.eq.s32.totalorder %s31, 1
      %p427 = scmp.ne.s32.totalorder %s422, %s424
      %p428 = scmp.eq.s32.totalorder %s31, 0
      %p429 = por %p427, %p428
      %p430 = scmp.ne.s32.totalorder %s422, %s424
      %p431 = scmp.eq.s32.totalorder %s36, 1
      %p432 = por %p430, %p431
      %p433 = scmp.ne.s32.totalorder %s424, %s425
      %p434 = scmp.eq.s32.totalorder %s36, 0
      %p435 = por %p433, %p434
      %p436 = scmp.ne.s32.totalorder %s424, %s425
      %p437 = scmp.eq.s32.totalorder %s37, 1
      %p438 = por %p436, %p437
      %p440 = scmp.ne.s32.totalorder %s425, %s439
      %p441 = scmp.eq.s32.totalorder %s37, 0
      %p442 = por %p440, %p441
      %s443 = ssub.s32 %s31, %s38
      %p444 = scmp.eq.s32.totalorder %s443, 0
      %s446 = sadd.s32 %s445, 1
      %s447 = scalar_select %p444, %s445, %s446
      %p450 = pneg %p444
      %p451 = scmp.eq.s32.totalorder %s31, 1
      %p452 = por %p450, %p451
      %p453 = scmp.ne.s32.totalorder %s445, %s448
      %p454 = scmp.eq.s32.totalorder %s31, 0
      %p455 = por %p453, %p454
      %p456 = scmp.ne.s32.totalorder %s445, %s448
      %p457 = scmp.eq.s32.totalorder %s36, 1
      %p458 = por %p456, %p457
      %p459 = scmp.ne.s32.totalorder %s448, %s449
      %p460 = scmp.eq.s32.totalorder %s36, 0
      %p461 = por %p459, %p460
      %p462 = scmp.ne.s32.totalorder %s448, %s449
      %p463 = scmp.eq.s32.totalorder %s37, 1
      %p464 = por %p462, %p463
      %p466 = scmp.ne.s32.totalorder %s449, %s465
      %p467 = scmp.eq.s32.totalorder %s37, 0
      %p468 = por %p466, %p467
      %p469 = scmp.le.s32.totalorder 1, %s31
      %p470 = scmp.lt.s32.totalorder %s31, 3
      %p471 = pnand %p469, %p470
      %p472 = pneg %p471
      // Predicated region
      $region9: #{net_forward.1} parent=5 // pred_check
        _
      $region10: #{net_forward.1} parent=5 // pred_check_branch
        %474 = sbr.rel (%p471) target = $region12
      $region11: #{net_forward.1} parent=5 // pred_region
        %s475 = ssub.s32 %s31, 1
        // Predicated region
        $region13: #{net_forward.1} parent=11 // pred_check
          %p476 = pneg %p78
        $region14: #{net_forward.1} parent=11 // pred_check_branch
          %478 = sbr.rel (%p476) target = $region16
        $region15: #{net_forward.1} parent=11 // pred_region
          _
        $region16: #{net_forward.1} parent=11 // pred_fallthru
          _
        // Predicated region
        $region17: #{net_forward.1} parent=11 // pred_check
          %p479 = pneg %p99
        $region18: #{net_forward.1} parent=11 // pred_check_branch
          %481 = sbr.rel (%p479) target = $region20
        $region19: #{net_forward.1} parent=11 // pred_region
          %483 = vsyncadd [#allocation3], 0
          %s485 = sshll.u32 %s2, 4
          %s486 = int_to_ptr.hbm [resolvable:$true] %s485
          %s487 = sshll.u32 [#allocation2], 4
          %s488 = int_to_ptr.vmem [resolvable:$true] %s487
          %490 = dma.hbm_to_vmem [thread:$0]  %s486, 32, %s488, [#allocation3]
        $region20: #{net_forward.1} parent=11 // pred_fallthru
          _
        // Predicated region
        $region21: #{net_forward.1} parent=11 // pred_check
          %p491 = pneg %p120
        $region22: #{net_forward.1} parent=11 // pred_check_branch
          %493 = sbr.rel (%p491) target = $region24
        $region23: #{net_forward.1} parent=11 // pred_region
          _
        $region24: #{net_forward.1} parent=11 // pred_fallthru
          _
        // Predicated region
        $region25: #{net_forward.1} parent=11 // pred_check
          %p494 = pneg %p141
        $region26: #{net_forward.1} parent=11 // pred_check_branch
          %496 = sbr.rel (%p494) target = $region28
        $region27: #{net_forward.1} parent=11 // pred_region
          _
        $region28: #{net_forward.1} parent=11 // pred_fallthru
          _
        // Predicated region
        $region29: #{net_forward.1} parent=11 // pred_check
          %p497 = pneg %p162
        $region30: #{net_forward.1} parent=11 // pred_check_branch
          %499 = sbr.rel (%p497) target = $region32
        $region31: #{net_forward.1} parent=11 // pred_region
          _
        $region32: #{net_forward.1} parent=11 // pred_fallthru
          _
        // Predicated region
        $region33: #{net_forward.1} parent=11 // pred_check
          %p500 = pneg %p183
        $region34: #{net_forward.1} parent=11 // pred_check_branch
          %502 = sbr.rel (%p500) target = $region36
        $region35: #{net_forward.1} parent=11 // pred_region
          _
        $region36: #{net_forward.1} parent=11 // pred_fallthru
          _
        // Predicated region
        $region37: #{net_forward.1} parent=11 // pred_check
          %p503 = pneg %p204
        $region38: #{net_forward.1} parent=11 // pred_check_branch
          %505 = sbr.rel (%p503) target = $region40
        $region39: #{net_forward.1} parent=11 // pred_region
          _
        $region40: #{net_forward.1} parent=11 // pred_fallthru
          _
        // Predicated region
        $region41: #{net_forward.1} parent=11 // pred_check
          %p506 = pneg %p225
        $region42: #{net_forward.1} parent=11 // pred_check_branch
          %508 = sbr.rel (%p506) target = $region44
        $region43: #{net_forward.1} parent=11 // pred_region
          %510 = vsyncadd [#allocation6], 0
          %s512 = sshll.u32 %s8, 4
          %s513 = int_to_ptr.hbm [resolvable:$true] %s512
          %s514 = sshll.u32 [#allocation5], 4
          %s515 = int_to_ptr.vmem [resolvable:$true] %s514
          %517 = dma.hbm_to_vmem [thread:$0]  %s513, 32, %s515, [#allocation6]
        $region44: #{net_forward.1} parent=11 // pred_fallthru
          _
        // Predicated region
        $region45: #{net_forward.1} parent=11 // pred_check
          %p518 = pneg %p246
        $region46: #{net_forward.1} parent=11 // pred_check_branch
          %520 = sbr.rel (%p518) target = $region48
        $region47: #{net_forward.1} parent=11 // pred_region
          _
        $region48: #{net_forward.1} parent=11 // pred_fallthru
          _
        // Predicated region
        $region49: #{net_forward.1} parent=11 // pred_check
          %p521 = pneg %p267
        $region50: #{net_forward.1} parent=11 // pred_check_branch
          %523 = sbr.rel (%p521) target = $region52
        $region51: #{net_forward.1} parent=11 // pred_region
          _
        $region52: #{net_forward.1} parent=11 // pred_fallthru
          _
        // Predicated region
        $region53: #{net_forward.1} parent=11 // pred_check
          %p524 = pneg %p288
        $region54: #{net_forward.1} parent=11 // pred_check_branch
          %526 = sbr.rel (%p524) target = $region56
        $region55: #{net_forward.1} parent=11 // pred_region
          _
        $region56: #{net_forward.1} parent=11 // pred_fallthru
          _
        // Predicated region
        $region57: #{net_forward.1} parent=11 // pred_check
          %p527 = pneg %p309
        $region58: #{net_forward.1} parent=11 // pred_check_branch
          %529 = sbr.rel (%p527) target = $region60
        $region59: #{net_forward.1} parent=11 // pred_region
          _
        $region60: #{net_forward.1} parent=11 // pred_fallthru
          _
        // Predicated region
        $region61: #{net_forward.1} parent=11 // pred_check
          %p530 = pneg %p330
        $region62: #{net_forward.1} parent=11 // pred_check_branch
          %532 = sbr.rel (%p530) target = $region64
        $region63: #{net_forward.1} parent=11 // pred_region
          _
        $region64: #{net_forward.1} parent=11 // pred_fallthru
          _
        // Predicated region
        $region65: #{net_forward.1} parent=11 // pred_check
          %p533 = pneg %p351
        $region66: #{net_forward.1} parent=11 // pred_check_branch
          %535 = sbr.rel (%p533) target = $region68
        $region67: #{net_forward.1} parent=11 // pred_region
          %537 = vsyncadd [#allocation6], 0
          %s539 = sshll.u32 %s14, 4
          %s540 = int_to_ptr.hbm [resolvable:$true] %s539
          %s541 = sshll.u32 [#allocation7], 4
          %s542 = int_to_ptr.vmem [resolvable:$true] %s541
          %544 = dma.hbm_to_vmem [thread:$0]  %s540, 16, %s542, [#allocation6]
        $region68: #{net_forward.1} parent=11 // pred_fallthru
          _
        // Predicated region
        $region69: #{net_forward.1} parent=11 // pred_check
          %p545 = pneg %p372
        $region70: #{net_forward.1} parent=11 // pred_check_branch
          %547 = sbr.rel (%p545) target = $region72
        $region71: #{net_forward.1} parent=11 // pred_region
          _
        $region72: #{net_forward.1} parent=11 // pred_fallthru
          _
        // Predicated region
        $region73: #{net_forward.1} parent=11 // pred_check
          %p548 = pneg %p393
        $region74: #{net_forward.1} parent=11 // pred_check_branch
          %550 = sbr.rel (%p548) target = $region76
        $region75: #{net_forward.1} parent=11 // pred_region
          %552 = vsyncadd [#allocation9], 0
          %s554 = sshll.u32 %s16, 4
          %s555 = int_to_ptr.hbm [resolvable:$true] %s554
          %s556 = sshll.u32 [#allocation8], 4
          %s557 = int_to_ptr.vmem [resolvable:$true] %s556
          %559 = dma.hbm_to_vmem [thread:$0]  %s555, 16, %s557, [#allocation9]
        $region76: #{net_forward.1} parent=11 // pred_fallthru
          _
        // Predicated region
        $region77: #{net_forward.1} parent=11 // pred_check
          %p560 = pneg %p414
        $region78: #{net_forward.1} parent=11 // pred_check_branch
          %562 = sbr.rel (%p560) target = $region80
        $region79: #{net_forward.1} parent=11 // pred_region
          _
        $region80: #{net_forward.1} parent=11 // pred_fallthru
          _
        // Predicated region
        $region81: #{net_forward.1} parent=11 // pred_check
          %p563 = pneg %p435
        $region82: #{net_forward.1} parent=11 // pred_check_branch
          %565 = sbr.rel (%p563) target = $region84
        $region83: #{net_forward.1} parent=11 // pred_region
          %567 = vsyncadd [#allocation9], 0
          %s569 = sshll.u32 %s18, 4
          %s570 = int_to_ptr.hbm [resolvable:$true] %s569
          %s571 = sshll.u32 [#allocation10], 4
          %s572 = int_to_ptr.vmem [resolvable:$true] %s571
          %574 = dma.hbm_to_vmem [thread:$0]  %s570, 16, %s572, [#allocation9]
        $region84: #{net_forward.1} parent=11 // pred_fallthru
          _
      $region12: #{net_forward.1} parent=5 // pred_fallthru
        _
      %p575 = scmp.lt.s32.totalorder %s31, 2
      // Predicated region
      $region85: #{net_forward.1} parent=5 // pred_check
        %p576 = pneg %p575
      $region86: #{net_forward.1} parent=5 // pred_check_branch
        %578 = sbr.rel (%p576) target = $region88
      $region87: #{net_forward.1} parent=5 // pred_region
        // Predicated region
        $region89: #{net_forward.1} parent=87 // pred_check
          %p579 = pneg %p51
        $region90: #{net_forward.1} parent=87 // pred_check_branch
          %581 = sbr.rel (%p579) target = $region92
        $region91: #{net_forward.1} parent=87 // pred_region
          %p582 = scmp.lt.s32.totalorder %s31, 1
          %s583 = scalar_select %p582, %s31, 1
          %s584 = smul.addr %s583, 4
          %s585 = smul.addr %s584, 8
          %s586 = scalar_lea.vmem %s0, %s585
        $region92: #{net_forward.1} parent=87 // pred_fallthru
          _
      $region88: #{net_forward.1} parent=5 // pred_fallthru
        _
      %p587 = scmp.le.s32.totalorder 1, %s31
      %p588 = scmp.lt.s32.totalorder %s31, 3
      %p589 = pnand %p587, %p588
      %p590 = pneg %p589
      // Predicated region
      $region93: #{net_forward.1} parent=5 // pred_check
        _
      $region94: #{net_forward.1} parent=5 // pred_check_branch
        %592 = sbr.rel (%p589) target = $region96
      $region95: #{net_forward.1} parent=5 // pred_region
        %s593 = ssub.s32 %s31, 1
        // Predicated region
        $region97: #{net_forward.1} parent=95 // pred_check
          %p594 = pneg %p99
        $region98: #{net_forward.1} parent=95 // pred_check_branch
          %596 = sbr.rel (%p594) target = $region100
        $region99: #{net_forward.1} parent=95 // pred_region
          %598 = dma.done [#allocation3], 32
        $region100: #{net_forward.1} parent=95 // pred_fallthru
          _
        // Predicated region
        $region101: #{net_forward.1} parent=95 // pred_check
          %p599 = pneg %p225
        $region102: #{net_forward.1} parent=95 // pred_check_branch
          %601 = sbr.rel (%p599) target = $region104
        $region103: #{net_forward.1} parent=95 // pred_region
          %603 = dma.done [#allocation6], 32
        $region104: #{net_forward.1} parent=95 // pred_fallthru
          _
        // Predicated region
        $region105: #{net_forward.1} parent=95 // pred_check
          %p604 = pneg %p351
        $region106: #{net_forward.1} parent=95 // pred_check_branch
          %606 = sbr.rel (%p604) target = $region108
        $region107: #{net_forward.1} parent=95 // pred_region
          %608 = dma.done [#allocation6], 16
        $region108: #{net_forward.1} parent=95 // pred_fallthru
          _
        // Predicated region
        $region109: #{net_forward.1} parent=95 // pred_check
          %p609 = pneg %p393
        $region110: #{net_forward.1} parent=95 // pred_check_branch
          %611 = sbr.rel (%p609) target = $region112
        $region111: #{net_forward.1} parent=95 // pred_region
          %613 = dma.done [#allocation9], 16
        $region112: #{net_forward.1} parent=95 // pred_fallthru
          _
        // Predicated region
        $region113: #{net_forward.1} parent=95 // pred_check
          %p614 = pneg %p435
        $region114: #{net_forward.1} parent=95 // pred_check_branch
          %616 = sbr.rel (%p614) target = $region116
        $region115: #{net_forward.1} parent=95 // pred_region
          %618 = dma.done [#allocation9], 16
        $region116: #{net_forward.1} parent=95 // pred_fallthru
          _
        %p619 = scmp.lt.s32.totalorder %s36, 1
        %s620 = scalar_select %p619, %s36, 1
        %s621 = smul.addr %s620, 4
        %s622 = smul.addr %s621, 8
        %s623 = scalar_lea.vmem %s0, %s622
        %p624 = pneg %p57
        %p625 = pneg %p54
        %p626 = pneg %p78
        %p627 = pneg %p75
        %p628 = pneg %p99
        %p629 = pneg %p96
        %p630 = pneg %p120
        %p631 = pneg %p117
        %p632 = pneg %p141
        %p633 = pneg %p138
        %p634 = pneg %p162
        %p635 = pneg %p159
        %p636 = pneg %p183
        %p637 = pneg %p180
        %p638 = pneg %p204
        %p639 = pneg %p201
        %p640 = pneg %p225
        %p641 = pneg %p222
        %p642 = pneg %p246
        %p643 = pneg %p243
        %p644 = pneg %p267
        %p645 = pneg %p264
        %p646 = pneg %p288
        %p647 = pneg %p285
        %p648 = pneg %p309
        %p649 = pneg %p306
        %p650 = pneg %p330
        %p651 = pneg %p327
        %p652 = pneg %p351
        %p653 = pneg %p348
        %p654 = pneg %p372
        %p655 = pneg %p369
        %p656 = pneg %p393
        %p657 = pneg %p390
        %p658 = pneg %p414
        %p659 = pneg %p411
        %p660 = pneg %p435
        %p661 = pneg %p432
        %p662 = pneg %p461
        %p663 = pneg %p458
        %s664 = sand.u32 %s448, 1
        %s665 = scalar_lea.sflag [#allocation4], %s664
        %s666 = sand.u32 %s448, 1
        %s667 = scalar_lea.vmem [#allocation11], %s666
        %p668 = scmp.lt.s32.totalorder %s36, 1
        %s669 = scalar_select %p668, %s36, 1
        %s670 = smul.addr %s669, 4
        %s671 = smul.addr %s670, 8
        %s672 = scalar_lea.vmem %s0, %s671
        %v674 = vld [vmem:[%s672] sm:$0xff]
        %v675 = vld [vmem:[%s672 + $0x8] sm:$0xff]
        %v676 = vld [vmem:[%s672 + $0x10] sm:$0xff]
        %v677 = vld [vmem:[%s672 + $0x18] sm:$0xff]
        %v678 = vld [vmem:[%s1] sm:$0xff]
        %v679 = vld [vmem:[%s1 + $0x8] sm:$0xff]
        %v680 = vld [vmem:[%s1 + $0x10] sm:$0xff]
        %v681 = vld [vmem:[%s1 + $0x18] sm:$0xff]
        %v682 = vpack.c.bf16 %v675, %v674
        %v683 = vpack.c.bf16 %v677, %v676
        %s684 = scalar_lea.vmem %s1, 32
        %v685 = vld [vmem:[%s684] sm:$0xff]
        %v686 = vld [vmem:[%s684 + $0x8] sm:$0xff]
        %v687 = vld [vmem:[%s684 + $0x10] sm:$0xff]
        %v688 = vld [vmem:[%s684 + $0x18] sm:$0xff]
        %vm689 = vsmask.f32 7424
        %v691 = vshrl.u32 %v682, 16
        %v693 = vshll.u32 %v682, 16
        %v695 = vrot.slane %v693, 1
        %v696 = vor.u32 %v691, %v695
        %v698 = vshll.u32 %v683, 16
        %v700 = vrot.slane %v698, 1
        %v701 = vsel %vm689, %v696, %v700
        %v702 = vshrl.u32 %v683, 16
        %v704 = vor.u32 %v702, %v700
        %v709 = vunpack.c.l.b16 %v685
        %v710 = vunpack.c.h.b16 %v685
        %v711 = vunpack.c.l.b16 %v686
        %v712 = vunpack.c.h.b16 %v686
        %v713 = vunpack.c.l.b16 %v687
        %v714 = vunpack.c.h.b16 %v687
        %v715 = vunpack.c.l.b16 %v688
        %v716 = vunpack.c.h.b16 %v688
        %v717 = vpack.c.b16 %v711, %v709
        %v718 = vpack.c.b16 %v712, %v710
        %v719 = vpack.c.b16 %v715, %v713
        %v720 = vpack.c.b16 %v716, %v714
        %vm725 = vcmask 261120
        %v727 = vsel %vm725, %v701, 0
        %v730 = vsel %vm725, %v704, 0
        %732 = vmatpush.bf16.msra.mxu0 0
        %733 = vmatpush.bf16.msra.mxu0 0
        %734 = vmatpush.bf16.msra.mxu0 0
        %735 = vmatpush.bf16.msra.mxu0 0
        %736 = vmatpush.bf16.msra.mxu0 0
        %737 = vmatpush.bf16.msra.mxu0 0
        %738 = vmatpush.bf16.msra.mxu0 %v719
        %739 = vmatpush.bf16.msra.mxu0 %v717
        %740 = vmatmul.bf16.gmra.mxu0 %v727
        %v741 = vpop.f32.mrf.mxu0
        %v742 = vadd.f32 0.0, %v741
        %v743 = vpop.f32.mrf.mxu0
        %v744 = vadd.f32 0.0, %v743
        %745 = vmatmul.bf16.gmra.mxu0 %v730
        %v746 = vpop.f32.mrf.mxu0
        %v747 = vadd.f32 0.0, %v746
        %v748 = vpop.f32.mrf.mxu0
        %v749 = vadd.f32 0.0, %v748
        %750 = vdwg.mxu0
        %751 = vmatpush.bf16.msra.mxu0 0
        %752 = vmatpush.bf16.msra.mxu0 0
        %753 = vmatpush.bf16.msra.mxu0 0
        %754 = vmatpush.bf16.msra.mxu0 0
        %755 = vmatpush.bf16.msra.mxu0 0
        %756 = vmatpush.bf16.msra.mxu0 0
        %757 = vmatpush.bf16.msra.mxu0 %v720
        %758 = vmatpush.bf16.msra.mxu0 %v718
        %759 = vmatmul.bf16.gmra.mxu0 %v727
        %v760 = vpop.f32.mrf.mxu0
        %v761 = vadd.f32 0.0, %v760
        %v762 = vpop.f32.mrf.mxu0
        %v763 = vadd.f32 0.0, %v762
        %764 = vmatmul.bf16.gmra.mxu0 %v730
        %v765 = vpop.f32.mrf.mxu0
        %v766 = vadd.f32 0.0, %v765
        %v767 = vpop.f32.mrf.mxu0
        %v768 = vadd.f32 0.0, %v767
        %769 = vdwg.mxu0
        %v774 = vunpack.c.l.b16 %v678
        %v775 = vunpack.c.h.b16 %v678
        %v776 = vunpack.c.l.b16 %v679
        %v777 = vunpack.c.h.b16 %v679
        %v778 = vunpack.c.l.b16 %v680
        %v779 = vunpack.c.h.b16 %v680
        %v780 = vunpack.c.l.b16 %v681
        %v781 = vunpack.c.h.b16 %v681
        %v782 = vpack.c.b16 %v776, %v774
        %v783 = vpack.c.b16 %v777, %v775
        %v784 = vpack.c.b16 %v780, %v778
        %v785 = vpack.c.b16 %v781, %v779
        %v790 = vsel %vm725, %v682, 0
        %v792 = vsel %vm725, %v683, 0
        %794 = vmatpush.bf16.msra.mxu0 0
        %795 = vmatpush.bf16.msra.mxu0 0
        %796 = vmatpush.bf16.msra.mxu0 0
        %797 = vmatpush.bf16.msra.mxu0 0
        %798 = vmatpush.bf16.msra.mxu0 0
        %799 = vmatpush.bf16.msra.mxu0 0
        %800 = vmatpush.bf16.msra.mxu0 %v784
        %801 = vmatpush.bf16.msra.mxu0 %v782
        %802 = vmatmul.bf16.gmra.mxu0 %v790
        %v803 = vpop.f32.mrf.mxu0
        %v804 = vadd.f32 %v742, %v803
        %v805 = vpop.f32.mrf.mxu0
        %v806 = vadd.f32 %v744, %v805
        %807 = vmatmul.bf16.gmra.mxu0 %v792
        %v808 = vpop.f32.mrf.mxu0
        %v809 = vadd.f32 %v747, %v808
        %v810 = vpop.f32.mrf.mxu0
        %v811 = vadd.f32 %v749, %v810
        %812 = vdwg.mxu0
        %813 = vmatpush.bf16.msra.mxu0 0
        %814 = vmatpush.bf16.msra.mxu0 0
        %815 = vmatpush.bf16.msra.mxu0 0
        %816 = vmatpush.bf16.msra.mxu0 0
        %817 = vmatpush.bf16.msra.mxu0 0
        %818 = vmatpush.bf16.msra.mxu0 0
        %819 = vmatpush.bf16.msra.mxu0 %v785
        %820 = vmatpush.bf16.msra.mxu0 %v783
        %821 = vmatmul.bf16.gmra.mxu0 %v790
        %v822 = vpop.f32.mrf.mxu0
        %v823 = vadd.f32 %v761, %v822
        %v824 = vpop.f32.mrf.mxu0
        %v825 = vadd.f32 %v763, %v824
        %826 = vmatmul.bf16.gmra.mxu0 %v792
        %v827 = vpop.f32.mrf.mxu0
        %v828 = vadd.f32 %v766, %v827
        %v829 = vpop.f32.mrf.mxu0
        %v830 = vadd.f32 %v768, %v829
        %831 = vdwg.mxu0
        %s832 = scalar_lea.vmem %s1, 64
        %v833 = vld [vmem:[%s832] sm:$0xff]
        %v834 = vld [vmem:[%s832 + $0x8] sm:$0xff]
        %v835 = vld [vmem:[%s832 + $0x10] sm:$0xff]
        %v836 = vld [vmem:[%s832 + $0x18] sm:$0xff]
        %vm839 = vcmask 1046528
        %v840 = vrot.slane %v682, 1
        %v841 = vrot.slane %v683, 1
        %v842 = vsel %vm839, %v840, %v841
        %v847 = vunpack.c.l.b16 %v833
        %v848 = vunpack.c.h.b16 %v833
        %v849 = vunpack.c.l.b16 %v834
        %v850 = vunpack.c.h.b16 %v834
        %v851 = vunpack.c.l.b16 %v835
        %v852 = vunpack.c.h.b16 %v835
        %v853 = vunpack.c.l.b16 %v836
        %v854 = vunpack.c.h.b16 %v836
        %v855 = vpack.c.b16 %v849, %v847
        %v856 = vpack.c.b16 %v850, %v848
        %v857 = vpack.c.b16 %v853, %v851
        %v858 = vpack.c.b16 %v854, %v852
        %v864 = vsel %vm725, %v842, 0
        %v867 = vsel %vm725, %v841, 0
        %869 = vmatpush.bf16.msra.mxu0 0
        %870 = vmatpush.bf16.msra.mxu0 0
        %871 = vmatpush.bf16.msra.mxu0 0
        %872 = vmatpush.bf16.msra.mxu0 0
        %873 = vmatpush.bf16.msra.mxu0 0
        %874 = vmatpush.bf16.msra.mxu0 0
        %875 = vmatpush.bf16.msra.mxu0 %v857
        %876 = vmatpush.bf16.msra.mxu0 %v855
        %877 = vmatmul.bf16.gmra.mxu0 %v864
        %v878 = vpop.f32.mrf.mxu0
        %v879 = vadd.f32 0.0, %v878
        %v880 = vpop.f32.mrf.mxu0
        %v881 = vadd.f32 0.0, %v880
        %882 = vmatmul.bf16.gmra.mxu0 %v867
        %v883 = vpop.f32.mrf.mxu0
        %v884 = vadd.f32 0.0, %v883
        %v885 = vpop.f32.mrf.mxu0
        %v886 = vadd.f32 0.0, %v885
        %887 = vdwg.mxu0
        %888 = vmatpush.bf16.msra.mxu0 0
        %889 = vmatpush.bf16.msra.mxu0 0
        %890 = vmatpush.bf16.msra.mxu0 0
        %891 = vmatpush.bf16.msra.mxu0 0
        %892 = vmatpush.bf16.msra.mxu0 0
        %893 = vmatpush.bf16.msra.mxu0 0
        %894 = vmatpush.bf16.msra.mxu0 %v858
        %895 = vmatpush.bf16.msra.mxu0 %v856
        %896 = vmatmul.bf16.gmra.mxu0 %v864
        %v897 = vpop.f32.mrf.mxu0
        %v898 = vadd.f32 0.0, %v897
        %v899 = vpop.f32.mrf.mxu0
        %v900 = vadd.f32 0.0, %v899
        %901 = vmatmul.bf16.gmra.mxu0 %v867
        %v902 = vpop.f32.mrf.mxu0
        %v903 = vadd.f32 0.0, %v902
        %v904 = vpop.f32.mrf.mxu0
        %v905 = vadd.f32 0.0, %v904
        %906 = vdwg.mxu0
        %v907 = vadd.f32 %v804, %v879
        %v908 = vadd.f32 %v823, %v898
        %v909 = vadd.f32 %v806, %v881
        %v910 = vadd.f32 %v825, %v900
        %v911 = vadd.f32 %v809, %v884
        %v912 = vadd.f32 %v828, %v903
        %v913 = vadd.f32 %v811, %v886
        %v914 = vadd.f32 %v830, %v905
        %s915 = scalar_lea.vmem %s1, 96
        %v916 = vld [vmem:[%s915] sm:$0xff]
        %v917 = vld [vmem:[%s915 + $0x8] sm:$0xff]
        %v918 = vld [vmem:[%s915 + $0x10] sm:$0xff]
        %v919 = vld [vmem:[%s915 + $0x18] sm:$0xff]
        %vm920 = vsmask.f32 6400
        %v921 = vrot.slane %v691, 1
        %v922 = vrot.slane %v693, 2
        %v923 = vor.u32 %v921, %v922
        %v924 = vrot.slane %v702, 1
        %v925 = vrot.slane %v698, 2
        %v926 = vor.u32 %v924, %v925
        %v927 = vsel %vm920, %v923, %v926
        %v932 = vunpack.c.l.b16 %v916
        %v933 = vunpack.c.h.b16 %v916
        %v934 = vunpack.c.l.b16 %v917
        %v935 = vunpack.c.h.b16 %v917
        %v936 = vunpack.c.l.b16 %v918
        %v937 = vunpack.c.h.b16 %v918
        %v938 = vunpack.c.l.b16 %v919
        %v939 = vunpack.c.h.b16 %v919
        %v940 = vpack.c.b16 %v934, %v932
        %v941 = vpack.c.b16 %v935, %v933
        %v942 = vpack.c.b16 %v938, %v936
        %v943 = vpack.c.b16 %v939, %v937
        %v949 = vsel %vm725, %v927, 0
        %v952 = vsel %vm725, %v926, 0
        %954 = vmatpush.bf16.msra.mxu0 0
        %955 = vmatpush.bf16.msra.mxu0 0
        %956 = vmatpush.bf16.msra.mxu0 0
        %957 = vmatpush.bf16.msra.mxu0 0
        %958 = vmatpush.bf16.msra.mxu0 0
        %959 = vmatpush.bf16.msra.mxu0 0
        %960 = vmatpush.bf16.msra.mxu0 %v942
        %961 = vmatpush.bf16.msra.mxu0 %v940
        %962 = vmatmul.bf16.gmra.mxu0 %v949
        %v963 = vpop.f32.mrf.mxu0
        %v964 = vadd.f32 0.0, %v963
        %v965 = vpop.f32.mrf.mxu0
        %v966 = vadd.f32 0.0, %v965
        %967 = vmatmul.bf16.gmra.mxu0 %v952
        %v968 = vpop.f32.mrf.mxu0
        %v969 = vadd.f32 0.0, %v968
        %v970 = vpop.f32.mrf.mxu0
        %v971 = vadd.f32 0.0, %v970
        %972 = vdwg.mxu0
        %973 = vmatpush.bf16.msra.mxu0 0
        %974 = vmatpush.bf16.msra.mxu0 0
        %975 = vmatpush.bf16.msra.mxu0 0
        %976 = vmatpush.bf16.msra.mxu0 0
        %977 = vmatpush.bf16.msra.mxu0 0
        %978 = vmatpush.bf16.msra.mxu0 0
        %979 = vmatpush.bf16.msra.mxu0 %v943
        %980 = vmatpush.bf16.msra.mxu0 %v941
        %981 = vmatmul.bf16.gmra.mxu0 %v949
        %v982 = vpop.f32.mrf.mxu0
        %v983 = vadd.f32 0.0, %v982
        %v984 = vpop.f32.mrf.mxu0
        %v985 = vadd.f32 0.0, %v984
        %986 = vmatmul.bf16.gmra.mxu0 %v952
        %v987 = vpop.f32.mrf.mxu0
        %v988 = vadd.f32 0.0, %v987
        %v989 = vpop.f32.mrf.mxu0
        %v990 = vadd.f32 0.0, %v989
        %991 = vdwg.mxu0
        %v992 = vadd.f32 %v907, %v964
        %v993 = vadd.f32 %v908, %v983
        %v994 = vadd.f32 %v909, %v966
        %v995 = vadd.f32 %v910, %v985
        %v996 = vadd.f32 %v911, %v969
        %v997 = vadd.f32 %v912, %v988
        %v998 = vadd.f32 %v913, %v971
        %v999 = vadd.f32 %v914, %v990
        %s1000 = scalar_lea.vmem %s1, 128
        %v1001 = vld [vmem:[%s1000] sm:$0xff]
        %v1002 = vld [vmem:[%s1000 + $0x8] sm:$0xff]
        %v1003 = vld [vmem:[%s1000 + $0x10] sm:$0xff]
        %v1004 = vld [vmem:[%s1000 + $0x18] sm:$0xff]
        %vm1005 = vcmask 1045504
        %v1006 = vrot.slane %v682, 2
        %v1007 = vrot.slane %v683, 2
        %v1008 = vsel %vm1005, %v1006, %v1007
        %v1013 = vunpack.c.l.b16 %v1001
        %v1014 = vunpack.c.h.b16 %v1001
        %v1015 = vunpack.c.l.b16 %v1002
        %v1016 = vunpack.c.h.b16 %v1002
        %v1017 = vunpack.c.l.b16 %v1003
        %v1018 = vunpack.c.h.b16 %v1003
        %v1019 = vunpack.c.l.b16 %v1004
        %v1020 = vunpack.c.h.b16 %v1004
        %v1021 = vpack.c.b16 %v1015, %v1013
        %v1022 = vpack.c.b16 %v1016, %v1014
        %v1023 = vpack.c.b16 %v1019, %v1017
        %v1024 = vpack.c.b16 %v1020, %v1018
        %v1030 = vsel %vm725, %v1008, 0
        %v1033 = vsel %vm725, %v1007, 0
        %1035 = vmatpush.bf16.msra.mxu0 0
        %1036 = vmatpush.bf16.msra.mxu0 0
        %1037 = vmatpush.bf16.msra.mxu0 0
        %1038 = vmatpush.bf16.msra.mxu0 0
        %1039 = vmatpush.bf16.msra.mxu0 0
        %1040 = vmatpush.bf16.msra.mxu0 0
        %1041 = vmatpush.bf16.msra.mxu0 %v1023
        %1042 = vmatpush.bf16.msra.mxu0 %v1021
        %1043 = vmatmul.bf16.gmra.mxu0 %v1030
        %v1044 = vpop.f32.mrf.mxu0
        %v1045 = vadd.f32 0.0, %v1044
        %v1046 = vpop.f32.mrf.mxu0
        %v1047 = vadd.f32 0.0, %v1046
        %1048 = vmatmul.bf16.gmra.mxu0 %v1033
        %v1049 = vpop.f32.mrf.mxu0
        %v1050 = vadd.f32 0.0, %v1049
        %v1051 = vpop.f32.mrf.mxu0
        %v1052 = vadd.f32 0.0, %v1051
        %1053 = vdwg.mxu0
        %1054 = vmatpush.bf16.msra.mxu0 0
        %1055 = vmatpush.bf16.msra.mxu0 0
        %1056 = vmatpush.bf16.msra.mxu0 0
        %1057 = vmatpush.bf16.msra.mxu0 0
        %1058 = vmatpush.bf16.msra.mxu0 0
        %1059 = vmatpush.bf16.msra.mxu0 0
        %1060 = vmatpush.bf16.msra.mxu0 %v1024
        %1061 = vmatpush.bf16.msra.mxu0 %v1022
        %1062 = vmatmul.bf16.gmra.mxu0 %v1030
        %v1063 = vpop.f32.mrf.mxu0
        %v1064 = vadd.f32 0.0, %v1063
        %v1065 = vpop.f32.mrf.mxu0
        %v1066 = vadd.f32 0.0, %v1065
        %1067 = vmatmul.bf16.gmra.mxu0 %v1033
        %v1068 = vpop.f32.mrf.mxu0
        %v1069 = vadd.f32 0.0, %v1068
        %v1070 = vpop.f32.mrf.mxu0
        %v1071 = vadd.f32 0.0, %v1070
        %1072 = vdwg.mxu0
        %v1073 = vadd.f32 %v992, %v1045
        %v1074 = vadd.f32 %v993, %v1064
        %v1075 = vadd.f32 %v994, %v1047
        %v1076 = vadd.f32 %v995, %v1066
        %v1077 = vadd.f32 %v996, %v1050
        %v1078 = vadd.f32 %v997, %v1069
        %v1079 = vadd.f32 %v998, %v1052
        %v1080 = vadd.f32 %v999, %v1071
        %v1081 = vld [vmem:[#allocation2] sm:$0x3]
        %v1083 = vperm.slane %v1081, 0
        %v1084 = vperm.slane %v1081, 1
        %v1087 = vadd.f32 %v1073, %v1083
        %v1088 = vadd.f32 %v1074, %v1084
        %v1089 = vadd.f32 %v1075, %v1083
        %v1090 = vadd.f32 %v1076, %v1084
        %v1091 = vadd.f32 %v1077, %v1083
        %v1092 = vadd.f32 %v1078, %v1084
        %v1093 = vadd.f32 %v1079, %v1083
        %v1094 = vadd.f32 %v1080, %v1084
        %v1095 = vmax.f32 %v1087, 0.0
        %v1096 = vmax.f32 %v1088, 0.0
        %v1097 = vmax.f32 %v1089, 0.0
        %v1098 = vmax.f32 %v1090, 0.0
        %v1099 = vmax.f32 %v1091, 0.0
        %v1100 = vmax.f32 %v1092, 0.0
        %v1101 = vmax.f32 %v1093, 0.0
        %v1102 = vmax.f32 %v1094, 0.0
        %v1103 = vpack.c.bf16 %v1097, %v1095
        %v1104 = vpack.c.bf16 %v1098, %v1096
        %v1105 = vpack.c.bf16 %v1101, %v1099
        %v1106 = vpack.c.bf16 %v1102, %v1100
        %v1107 = vld [vmem:[%s3] sm:$0xf]
        %v1108 = vld [vmem:[%s3 + $0x4] sm:$0x7]
        %v1111 = vunpack.c.l.b16 %v1107
        %v1112 = vunpack.c.l.b16 %v1108
        %v1113 = vpack.c.b16 %v1112, %v1111
        %vm1114 = vcmask 228352
        %v1116 = vsel %vm1114, %v1113, 0
        %vm1118 = vcmask 1045504
        %v1120 = vsel %vm1118, %v1105, 0
        %v1123 = vsel %vm1118, %v1106, 0
        %1125 = vmatpush.bf16.msra.mxu0 0
        %1126 = vmatpush.bf16.msra.mxu0 0
        %1127 = vmatpush.bf16.msra.mxu0 0
        %1128 = vmatpush.bf16.msra.mxu0 0
        %1129 = vmatpush.bf16.msra.mxu0 0
        %1130 = vmatpush.bf16.msra.mxu0 0
        %1131 = vmatpush.bf16.msra.mxu0 %v1120
        %1132 = vmatpush.bf16.msra.mxu0 %v1103
        %1133 = vmatmul.bf16.gmra.mxu0 %v1116
        %v1134 = vpop.f32.mrf.mxu0
        %v1135 = vadd.f32 0.0, %v1134
        %v1136 = vpop.f32.mrf.mxu0
        %v1137 = vadd.f32 0.0, %v1136
        %1138 = vdwg.mxu0
        %1139 = vmatpush.bf16.msra.mxu0 0
        %1140 = vmatpush.bf16.msra.mxu0 0
        %1141 = vmatpush.bf16.msra.mxu0 0
        %1142 = vmatpush.bf16.msra.mxu0 0
        %1143 = vmatpush.bf16.msra.mxu0 0
        %1144 = vmatpush.bf16.msra.mxu0 0
        %1145 = vmatpush.bf16.msra.mxu0 %v1123
        %1146 = vmatpush.bf16.msra.mxu0 %v1104
        %1147 = vmatmul.bf16.gmra.mxu0 %v1116
        %v1148 = vpop.f32.mrf.mxu0
        %v1149 = vadd.f32 0.0, %v1148
        %v1150 = vpop.f32.mrf.mxu0
        %v1151 = vadd.f32 0.0, %v1150
        %1152 = vdwg.mxu0
        %v1153 = vld [vmem:[%s4] sm:$0xf]
        %v1154 = vld [vmem:[%s4 + $0x4] sm:$0x7]
        %v1157 = vunpack.c.l.b16 %v1153
        %v1158 = vunpack.c.l.b16 %v1154
        %v1159 = vpack.c.b16 %v1158, %v1157
        %v1161 = vsel %vm1114, %v1159, 0
        %1163 = vmatpush.bf16.msra.mxu0 0
        %1164 = vmatpush.bf16.msra.mxu0 0
        %1165 = vmatpush.bf16.msra.mxu0 0
        %1166 = vmatpush.bf16.msra.mxu0 0
        %1167 = vmatpush.bf16.msra.mxu0 0
        %1168 = vmatpush.bf16.msra.mxu0 0
        %1169 = vmatpush.bf16.msra.mxu0 %v1120
        %1170 = vmatpush.bf16.msra.mxu0 %v1103
        %1171 = vmatmul.bf16.gmra.mxu0 %v1161
        %v1172 = vpop.f32.mrf.mxu0
        %v1173 = vadd.f32 0.0, %v1172
        %v1174 = vpop.f32.mrf.mxu0
        %v1175 = vadd.f32 0.0, %v1174
        %1176 = vdwg.mxu0
        %1177 = vmatpush.bf16.msra.mxu0 0
        %1178 = vmatpush.bf16.msra.mxu0 0
        %1179 = vmatpush.bf16.msra.mxu0 0
        %1180 = vmatpush.bf16.msra.mxu0 0
        %1181 = vmatpush.bf16.msra.mxu0 0
        %1182 = vmatpush.bf16.msra.mxu0 0
        %1183 = vmatpush.bf16.msra.mxu0 %v1123
        %1184 = vmatpush.bf16.msra.mxu0 %v1104
        %1185 = vmatmul.bf16.gmra.mxu0 %v1161
        %v1186 = vpop.f32.mrf.mxu0
        %v1187 = vadd.f32 0.0, %v1186
        %v1188 = vpop.f32.mrf.mxu0
        %v1189 = vadd.f32 0.0, %v1188
        %1190 = vdwg.mxu0
        %v1191 = vmax.f32 %v1135, %v1173
        %v1192 = vmax.f32 %v1149, %v1187
        %v1193 = vmax.f32 %v1137, %v1175
        %v1194 = vmax.f32 %v1151, %v1189
        %v1195 = vpack.c.bf16 %v1193, %v1191
        %v1196 = vpack.c.bf16 %v1194, %v1192
        %v1197 = vld [vmem:[%s5] sm:$0xf]
        %v1198 = vld [vmem:[%s5 + $0x4] sm:$0xf]
        %v1199 = vld [vmem:[%s5 + $0x8] sm:$0xf]
        %v1200 = vld [vmem:[%s5 + $0xc] sm:$0xf]
        %v1201 = vld [vmem:[%s5 + $0x10] sm:$0xf]
        %v1202 = vld [vmem:[%s5 + $0x14] sm:$0xf]
        %v1203 = vld [vmem:[%s5 + $0x18] sm:$0xf]
        %v1204 = vld [vmem:[%s5 + $0x1c] sm:$0xf]
        %v1205 = vld [vmem:[%s5 + $0x20] sm:$0xf]
        %v1206 = vld [vmem:[%s5 + $0x24] sm:$0xf]
        %v1207 = vld [vmem:[%s5 + $0x28] sm:$0xf]
        %v1208 = vld [vmem:[%s5 + $0x2c] sm:$0xf]
        %v1209 = vld [vmem:[%s5 + $0x30] sm:$0xf]
        %v1210 = vld [vmem:[%s5 + $0x34] sm:$0xf]
        %v1211 = vld [vmem:[%s5 + $0x38] sm:$0xf]
        %v1212 = vld [vmem:[%s5 + $0x3c] sm:$0xf]
        %v1213 = vld [vmem:[%s5 + $0x40] sm:$0xf]
        %v1214 = vld [vmem:[%s5 + $0x44] sm:$0xf]
        %v1215 = vld [vmem:[%s5 + $0x48] sm:$0xf]
        %v1216 = vld [vmem:[%s5 + $0x4c] sm:$0xf]
        %v1217 = vld [vmem:[%s5 + $0x50] sm:$0xf]
        %v1218 = vld [vmem:[%s5 + $0x54] sm:$0xf]
        %v1219 = vld [vmem:[%s5 + $0x58] sm:$0xf]
        %v1220 = vld [vmem:[%s5 + $0x5c] sm:$0xf]
        %v1221 = vld [vmem:[%s5 + $0x60] sm:$0xf]
        %v1222 = vld [vmem:[%s5 + $0x64] sm:$0xf]
        %v1223 = vld [vmem:[%s5 + $0x68] sm:$0xf]
        %v1224 = vld [vmem:[%s5 + $0x6c] sm:$0xf]
        %v1253 = vunpack.c.l.b16 %v1197
        %v1254 = vunpack.c.l.b16 %v1198
        %v1255 = vunpack.c.l.b16 %v1199
        %v1256 = vunpack.c.l.b16 %v1200
        %v1257 = vunpack.c.l.b16 %v1201
        %v1258 = vunpack.c.l.b16 %v1202
        %v1259 = vunpack.c.l.b16 %v1203
        %v1260 = vunpack.c.l.b16 %v1204
        %v1261 = vunpack.c.l.b16 %v1205
        %v1262 = vunpack.c.l.b16 %v1206
        %v1263 = vunpack.c.l.b16 %v1207
        %v1264 = vunpack.c.l.b16 %v1208
        %v1265 = vunpack.c.l.b16 %v1209
        %v1266 = vunpack.c.l.b16 %v1210
        %v1267 = vunpack.c.l.b16 %v1211
        %v1268 = vunpack.c.l.b16 %v1212
        %v1269 = vunpack.c.l.b16 %v1213
        %v1270 = vunpack.c.l.b16 %v1214
        %v1271 = vunpack.c.l.b16 %v1215
        %v1272 = vunpack.c.l.b16 %v1216
        %v1273 = vunpack.c.l.b16 %v1217
        %v1274 = vunpack.c.l.b16 %v1218
        %v1275 = vunpack.c.l.b16 %v1219
        %v1276 = vunpack.c.l.b16 %v1220
        %v1277 = vunpack.c.l.b16 %v1221
        %v1278 = vunpack.c.l.b16 %v1222
        %v1279 = vunpack.c.l.b16 %v1223
        %v1280 = vunpack.c.l.b16 %v1224
        %v1281 = vpack.c.b16 %v1254, %v1253
        %v1282 = vpack.c.b16 %v1256, %v1255
        %v1283 = vpack.c.b16 %v1258, %v1257
        %v1284 = vpack.c.b16 %v1260, %v1259
        %v1285 = vpack.c.b16 %v1262, %v1261
        %v1286 = vpack.c.b16 %v1264, %v1263
        %v1287 = vpack.c.b16 %v1266, %v1265
        %v1288 = vpack.c.b16 %v1268, %v1267
        %v1289 = vpack.c.b16 %v1270, %v1269
        %v1290 = vpack.c.b16 %v1272, %v1271
        %v1291 = vpack.c.b16 %v1274, %v1273
        %v1292 = vpack.c.b16 %v1276, %v1275
        %v1293 = vpack.c.b16 %v1278, %v1277
        %v1294 = vpack.c.b16 %v1280, %v1279
        %vm1309 = vcmask 785408
        %v1311 = vsel %vm1309, %v1196, 0
        %1313 = vmatpush.bf16.msra.mxu0 %v1288
        %1314 = vmatpush.bf16.msra.mxu0 %v1287
        %1315 = vmatpush.bf16.msra.mxu0 %v1286
        %1316 = vmatpush.bf16.msra.mxu0 %v1285
        %1317 = vmatpush.bf16.msra.mxu0 %v1284
        %1318 = vmatpush.bf16.msra.mxu0 %v1283
        %1319 = vmatpush.bf16.msra.mxu0 %v1282
        %1320 = vmatpush.bf16.msra.mxu0 %v1281
        %1321 = vmatmul.bf16.gmra.mxu0 %v1195
        %v1322 = vpop.f32.mrf.mxu0
        %v1323 = vadd.f32 0.0, %v1322
        %v1324 = vpop.f32.mrf.mxu0
        %v1325 = vadd.f32 0.0, %v1324
        %1326 = vdwg.mxu0
        %1327 = vmatpush.bf16.msra.mxu0 0
        %1328 = vmatpush.bf16.msra.mxu0 0
        %1329 = vmatpush.bf16.msra.mxu0 %v1294
        %1330 = vmatpush.bf16.msra.mxu0 %v1293
        %1331 = vmatpush.bf16.msra.mxu0 %v1292
        %1332 = vmatpush.bf16.msra.mxu0 %v1291
        %1333 = vmatpush.bf16.msra.mxu0 %v1290
        %1334 = vmatpush.bf16.msra.mxu0 %v1289
        %1335 = vmatmul.bf16.gmra.mxu0 %v1311
        %v1336 = vpop.f32.mrf.mxu0
        %v1337 = vadd.f32 %v1323, %v1336
        %v1338 = vpop.f32.mrf.mxu0
        %v1339 = vadd.f32 %v1325, %v1338
        %1340 = vdwg.mxu0
        %v1341 = vld [vmem:[%s6] sm:$0xf]
        %v1342 = vld [vmem:[%s6 + $0x4] sm:$0xf]
        %v1343 = vld [vmem:[%s6 + $0x8] sm:$0xf]
        %v1344 = vld [vmem:[%s6 + $0xc] sm:$0xf]
        %v1345 = vld [vmem:[%s6 + $0x10] sm:$0xf]
        %v1346 = vld [vmem:[%s6 + $0x14] sm:$0xf]
        %v1347 = vld [vmem:[%s6 + $0x18] sm:$0xf]
        %v1348 = vld [vmem:[%s6 + $0x1c] sm:$0xf]
        %v1349 = vld [vmem:[%s6 + $0x20] sm:$0xf]
        %v1350 = vld [vmem:[%s6 + $0x24] sm:$0xf]
        %v1351 = vld [vmem:[%s6 + $0x28] sm:$0xf]
        %v1352 = vld [vmem:[%s6 + $0x2c] sm:$0xf]
        %v1353 = vld [vmem:[%s6 + $0x30] sm:$0xf]
        %v1354 = vld [vmem:[%s6 + $0x34] sm:$0xf]
        %v1355 = vld [vmem:[%s6 + $0x38] sm:$0xf]
        %v1356 = vld [vmem:[%s6 + $0x3c] sm:$0xf]
        %v1357 = vld [vmem:[%s6 + $0x40] sm:$0xf]
        %v1358 = vld [vmem:[%s6 + $0x44] sm:$0xf]
        %v1359 = vld [vmem:[%s6 + $0x48] sm:$0xf]
        %v1360 = vld [vmem:[%s6 + $0x4c] sm:$0xf]
        %v1361 = vld [vmem:[%s6 + $0x50] sm:$0xf]
        %v1362 = vld [vmem:[%s6 + $0x54] sm:$0xf]
        %v1363 = vld [vmem:[%s6 + $0x58] sm:$0xf]
        %v1364 = vld [vmem:[%s6 + $0x5c] sm:$0xf]
        %v1365 = vld [vmem:[%s6 + $0x60] sm:$0xf]
        %v1366 = vld [vmem:[%s6 + $0x64] sm:$0xf]
        %v1367 = vld [vmem:[%s6 + $0x68] sm:$0xf]
        %v1368 = vld [vmem:[%s6 + $0x6c] sm:$0xf]
        %v1397 = vunpack.c.l.b16 %v1341
        %v1398 = vunpack.c.l.b16 %v1342
        %v1399 = vunpack.c.l.b16 %v1343
        %v1400 = vunpack.c.l.b16 %v1344
        %v1401 = vunpack.c.l.b16 %v1345
        %v1402 = vunpack.c.l.b16 %v1346
        %v1403 = vunpack.c.l.b16 %v1347
        %v1404 = vunpack.c.l.b16 %v1348
        %v1405 = vunpack.c.l.b16 %v1349
        %v1406 = vunpack.c.l.b16 %v1350
        %v1407 = vunpack.c.l.b16 %v1351
        %v1408 = vunpack.c.l.b16 %v1352
        %v1409 = vunpack.c.l.b16 %v1353
        %v1410 = vunpack.c.l.b16 %v1354
        %v1411 = vunpack.c.l.b16 %v1355
        %v1412 = vunpack.c.l.b16 %v1356
        %v1413 = vunpack.c.l.b16 %v1357
        %v1414 = vunpack.c.l.b16 %v1358
        %v1415 = vunpack.c.l.b16 %v1359
        %v1416 = vunpack.c.l.b16 %v1360
        %v1417 = vunpack.c.l.b16 %v1361
        %v1418 = vunpack.c.l.b16 %v1362
        %v1419 = vunpack.c.l.b16 %v1363
        %v1420 = vunpack.c.l.b16 %v1364
        %v1421 = vunpack.c.l.b16 %v1365
        %v1422 = vunpack.c.l.b16 %v1366
        %v1423 = vunpack.c.l.b16 %v1367
        %v1424 = vunpack.c.l.b16 %v1368
        %v1425 = vpack.c.b16 %v1398, %v1397
        %v1426 = vpack.c.b16 %v1400, %v1399
        %v1427 = vpack.c.b16 %v1402, %v1401
        %v1428 = vpack.c.b16 %v1404, %v1403
        %v1429 = vpack.c.b16 %v1406, %v1405
        %v1430 = vpack.c.b16 %v1408, %v1407
        %v1431 = vpack.c.b16 %v1410, %v1409
        %v1432 = vpack.c.b16 %v1412, %v1411
        %v1433 = vpack.c.b16 %v1414, %v1413
        %v1434 = vpack.c.b16 %v1416, %v1415
        %v1435 = vpack.c.b16 %v1418, %v1417
        %v1436 = vpack.c.b16 %v1420, %v1419
        %v1437 = vpack.c.b16 %v1422, %v1421
        %v1438 = vpack.c.b16 %v1424, %v1423
        %1453 = vmatpush.bf16.msra.mxu0 %v1432
        %1454 = vmatpush.bf16.msra.mxu0 %v1431
        %1455 = vmatpush.bf16.msra.mxu0 %v1430
        %1456 = vmatpush.bf16.msra.mxu0 %v1429
        %1457 = vmatpush.bf16.msra.mxu0 %v1428
        %1458 = vmatpush.bf16.msra.mxu0 %v1427
        %1459 = vmatpush.bf16.msra.mxu0 %v1426
        %1460 = vmatpush.bf16.msra.mxu0 %v1425
        %1461 = vmatmul.bf16.gmra.mxu0 %v1195
        %v1462 = vpop.f32.mrf.mxu0
        %v1463 = vadd.f32 0.0, %v1462
        %v1464 = vpop.f32.mrf.mxu0
        %v1465 = vadd.f32 0.0, %v1464
        %1466 = vdwg.mxu0
        %1467 = vmatpush.bf16.msra.mxu0 0
        %1468 = vmatpush.bf16.msra.mxu0 0
        %1469 = vmatpush.bf16.msra.mxu0 %v1438
        %1470 = vmatpush.bf16.msra.mxu0 %v1437
        %1471 = vmatpush.bf16.msra.mxu0 %v1436
        %1472 = vmatpush.bf16.msra.mxu0 %v1435
        %1473 = vmatpush.bf16.msra.mxu0 %v1434
        %1474 = vmatpush.bf16.msra.mxu0 %v1433
        %1475 = vmatmul.bf16.gmra.mxu0 %v1311
        %v1476 = vpop.f32.mrf.mxu0
        %v1477 = vadd.f32 %v1463, %v1476
        %v1478 = vpop.f32.mrf.mxu0
        %v1479 = vadd.f32 %v1465, %v1478
        %1480 = vdwg.mxu0
        %v1481 = vmax.f32 %v1337, %v1477
        %v1482 = vmax.f32 %v1339, %v1479
        %v1483 = vld [vmem:[%s7] sm:$0xff]
        %v1484 = vld [vmem:[%s7 + $0x8] sm:$0xff]
        %v1485 = vld [vmem:[%s7 + $0x10] sm:$0xff]
        %v1486 = vld [vmem:[%s7 + $0x18] sm:$0xff]
        %v1487 = vld [vmem:[%s7 + $0x20] sm:$0xff]
        %v1488 = vld [vmem:[%s7 + $0x28] sm:$0xff]
        %v1489 = vld [vmem:[%s7 + $0x30] sm:$0xff]
        %v1490 = vld [vmem:[%s7 + $0x38] sm:$0xff]
        %v1491 = vld [vmem:[%s7 + $0x40] sm:$0xff]
        %v1492 = vld [vmem:[%s7 + $0x48] sm:$0xff]
        %v1493 = vld [vmem:[%s7 + $0x50] sm:$0xff]
        %v1494 = vld [vmem:[%s7 + $0x58] sm:$0xff]
        %v1495 = vld [vmem:[%s7 + $0x60] sm:$0xff]
        %v1496 = vld [vmem:[%s7 + $0x68] sm:$0xff]
        %v1497 = vpack.c.bf16 %v1482, %v1481
        %s1498 = scalar_lea.vmem %s7, 112
        %v1499 = vld [vmem:[%s1498] sm:$0xff]
        %v1500 = vld [vmem:[%s1498 + $0x8] sm:$0xff]
        %v1501 = vld [vmem:[%s1498 + $0x10] sm:$0xff]
        %v1502 = vld [vmem:[%s1498 + $0x18] sm:$0xff]
        %v1503 = vld [vmem:[%s1498 + $0x20] sm:$0xff]
        %v1504 = vld [vmem:[%s1498 + $0x28] sm:$0xff]
        %v1505 = vld [vmem:[%s1498 + $0x30] sm:$0xff]
        %v1506 = vld [vmem:[%s1498 + $0x38] sm:$0xff]
        %v1507 = vld [vmem:[%s1498 + $0x40] sm:$0xff]
        %v1508 = vld [vmem:[%s1498 + $0x48] sm:$0xff]
        %v1509 = vld [vmem:[%s1498 + $0x50] sm:$0xff]
        %v1510 = vld [vmem:[%s1498 + $0x58] sm:$0xff]
        %v1511 = vld [vmem:[%s1498 + $0x60] sm:$0xff]
        %v1512 = vld [vmem:[%s1498 + $0x68] sm:$0xff]
        %v1514 = vshrl.u32 %v1497, 16
        %v1516 = vshll.u32 %v1497, 16
        %v1518 = vrot.slane %v1516, 1
        %v1519 = vor.u32 %v1514, %v1518
        %v1534 = vunpack.c.l.b16 %v1499
        %v1535 = vunpack.c.h.b16 %v1499
        %v1536 = vunpack.c.l.b16 %v1500
        %v1537 = vunpack.c.h.b16 %v1500
        %v1538 = vunpack.c.l.b16 %v1501
        %v1539 = vunpack.c.h.b16 %v1501
        %v1540 = vunpack.c.l.b16 %v1502
        %v1541 = vunpack.c.h.b16 %v1502
        %v1542 = vunpack.c.l.b16 %v1503
        %v1543 = vunpack.c.h.b16 %v1503
        %v1544 = vunpack.c.l.b16 %v1504
        %v1545 = vunpack.c.h.b16 %v1504
        %v1546 = vunpack.c.l.b16 %v1505
        %v1547 = vunpack.c.h.b16 %v1505
        %v1548 = vunpack.c.l.b16 %v1506
        %v1549 = vunpack.c.h.b16 %v1506
        %v1550 = vunpack.c.l.b16 %v1507
        %v1551 = vunpack.c.h.b16 %v1507
        %v1552 = vunpack.c.l.b16 %v1508
        %v1553 = vunpack.c.h.b16 %v1508
        %v1554 = vunpack.c.l.b16 %v1509
        %v1555 = vunpack.c.h.b16 %v1509
        %v1556 = vunpack.c.l.b16 %v1510
        %v1557 = vunpack.c.h.b16 %v1510
        %v1558 = vunpack.c.l.b16 %v1511
        %v1559 = vunpack.c.h.b16 %v1511
        %v1560 = vunpack.c.l.b16 %v1512
        %v1561 = vunpack.c.h.b16 %v1512
        %v1562 = vpack.c.b16 %v1536, %v1534
        %v1563 = vpack.c.b16 %v1537, %v1535
        %v1564 = vpack.c.b16 %v1540, %v1538
        %v1565 = vpack.c.b16 %v1541, %v1539
        %v1566 = vpack.c.b16 %v1544, %v1542
        %v1567 = vpack.c.b16 %v1545, %v1543
        %v1568 = vpack.c.b16 %v1548, %v1546
        %v1569 = vpack.c.b16 %v1549, %v1547
        %v1570 = vpack.c.b16 %v1552, %v1550
        %v1571 = vpack.c.b16 %v1553, %v1551
        %v1572 = vpack.c.b16 %v1556, %v1554
        %v1573 = vpack.c.b16 %v1557, %v1555
        %v1574 = vpack.c.b16 %v1560, %v1558
        %v1575 = vpack.c.b16 %v1561, %v1559
        %vm1590 = vcmask 916480
        %v1592 = vsel %vm1590, %v1519, 0
        %1594 = vmatpush.bf16.msra.mxu0 0
        %1595 = vmatpush.bf16.msra.mxu0 %v1574
        %1596 = vmatpush.bf16.msra.mxu0 %v1572
        %1597 = vmatpush.bf16.msra.mxu0 %v1570
        %1598 = vmatpush.bf16.msra.mxu0 %v1568
        %1599 = vmatpush.bf16.msra.mxu0 %v1566
        %1600 = vmatpush.bf16.msra.mxu0 %v1564
        %1601 = vmatpush.bf16.msra.mxu0 %v1562
        %1602 = vmatmul.bf16.gmra.mxu0 %v1592
        %v1603 = vpop.f32.mrf.mxu0
        %v1604 = vadd.f32 0.0, %v1603
        %v1605 = vpop.f32.mrf.mxu0
        %v1606 = vadd.f32 0.0, %v1605
        %1607 = vdwg.mxu0
        %1608 = vmatpush.bf16.msra.mxu0 0
        %1609 = vmatpush.bf16.msra.mxu0 %v1575
        %1610 = vmatpush.bf16.msra.mxu0 %v1573
        %1611 = vmatpush.bf16.msra.mxu0 %v1571
        %1612 = vmatpush.bf16.msra.mxu0 %v1569
        %1613 = vmatpush.bf16.msra.mxu0 %v1567
        %1614 = vmatpush.bf16.msra.mxu0 %v1565
        %1615 = vmatpush.bf16.msra.mxu0 %v1563
        %1616 = vmatmul.bf16.gmra.mxu0 %v1592
        %v1617 = vpop.f32.mrf.mxu0
        %v1618 = vadd.f32 0.0, %v1617
        %v1619 = vpop.f32.mrf.mxu0
        %v1620 = vadd.f32 0.0, %v1619
        %1621 = vdwg.mxu0
        %v1636 = vunpack.c.l.b16 %v1483
        %v1637 = vunpack.c.h.b16 %v1483
        %v1638 = vunpack.c.l.b16 %v1484
        %v1639 = vunpack.c.h.b16 %v1484
        %v1640 = vunpack.c.l.b16 %v1485
        %v1641 = vunpack.c.h.b16 %v1485
        %v1642 = vunpack.c.l.b16 %v1486
        %v1643 = vunpack.c.h.b16 %v1486
        %v1644 = vunpack.c.l.b16 %v1487
        %v1645 = vunpack.c.h.b16 %v1487
        %v1646 = vunpack.c.l.b16 %v1488
        %v1647 = vunpack.c.h.b16 %v1488
        %v1648 = vunpack.c.l.b16 %v1489
        %v1649 = vunpack.c.h.b16 %v1489
        %v1650 = vunpack.c.l.b16 %v1490
        %v1651 = vunpack.c.h.b16 %v1490
        %v1652 = vunpack.c.l.b16 %v1491
        %v1653 = vunpack.c.h.b16 %v1491
        %v1654 = vunpack.c.l.b16 %v1492
        %v1655 = vunpack.c.h.b16 %v1492
        %v1656 = vunpack.c.l.b16 %v1493
        %v1657 = vunpack.c.h.b16 %v1493
        %v1658 = vunpack.c.l.b16 %v1494
        %v1659 = vunpack.c.h.b16 %v1494
        %v1660 = vunpack.c.l.b16 %v1495
        %v1661 = vunpack.c.h.b16 %v1495
        %v1662 = vunpack.c.l.b16 %v1496
        %v1663 = vunpack.c.h.b16 %v1496
        %v1664 = vpack.c.b16 %v1638, %v1636
        %v1665 = vpack.c.b16 %v1639, %v1637
        %v1666 = vpack.c.b16 %v1642, %v1640
        %v1667 = vpack.c.b16 %v1643, %v1641
        %v1668 = vpack.c.b16 %v1646, %v1644
        %v1669 = vpack.c.b16 %v1647, %v1645
        %v1670 = vpack.c.b16 %v1650, %v1648
        %v1671 = vpack.c.b16 %v1651, %v1649
        %v1672 = vpack.c.b16 %v1654, %v1652
        %v1673 = vpack.c.b16 %v1655, %v1653
        %v1674 = vpack.c.b16 %v1658, %v1656
        %v1675 = vpack.c.b16 %v1659, %v1657
        %v1676 = vpack.c.b16 %v1662, %v1660
        %v1677 = vpack.c.b16 %v1663, %v1661
        %v1692 = vsel %vm1590, %v1497, 0
        %1694 = vmatpush.bf16.msra.mxu0 0
        %1695 = vmatpush.bf16.msra.mxu0 %v1676
        %1696 = vmatpush.bf16.msra.mxu0 %v1674
        %1697 = vmatpush.bf16.msra.mxu0 %v1672
        %1698 = vmatpush.bf16.msra.mxu0 %v1670
        %1699 = vmatpush.bf16.msra.mxu0 %v1668
        %1700 = vmatpush.bf16.msra.mxu0 %v1666
        %1701 = vmatpush.bf16.msra.mxu0 %v1664
        %1702 = vmatmul.bf16.gmra.mxu0 %v1692
        %v1703 = vpop.f32.mrf.mxu0
        %v1704 = vadd.f32 %v1604, %v1703
        %v1705 = vpop.f32.mrf.mxu0
        %v1706 = vadd.f32 %v1606, %v1705
        %1707 = vdwg.mxu0
        %1708 = vmatpush.bf16.msra.mxu0 0
        %1709 = vmatpush.bf16.msra.mxu0 %v1677
        %1710 = vmatpush.bf16.msra.mxu0 %v1675
        %1711 = vmatpush.bf16.msra.mxu0 %v1673
        %1712 = vmatpush.bf16.msra.mxu0 %v1671
        %1713 = vmatpush.bf16.msra.mxu0 %v1669
        %1714 = vmatpush.bf16.msra.mxu0 %v1667
        %1715 = vmatpush.bf16.msra.mxu0 %v1665
        %1716 = vmatmul.bf16.gmra.mxu0 %v1692
        %v1717 = vpop.f32.mrf.mxu0
        %v1718 = vadd.f32 %v1618, %v1717
        %v1719 = vpop.f32.mrf.mxu0
        %v1720 = vadd.f32 %v1620, %v1719
        %1721 = vdwg.mxu0
        %s1722 = scalar_lea.vmem %s7, 224
        %v1723 = vld [vmem:[%s1722] sm:$0xff]
        %v1724 = vld [vmem:[%s1722 + $0x8] sm:$0xff]
        %v1725 = vld [vmem:[%s1722 + $0x10] sm:$0xff]
        %v1726 = vld [vmem:[%s1722 + $0x18] sm:$0xff]
        %v1727 = vld [vmem:[%s1722 + $0x20] sm:$0xff]
        %v1728 = vld [vmem:[%s1722 + $0x28] sm:$0xff]
        %v1729 = vld [vmem:[%s1722 + $0x30] sm:$0xff]
        %v1730 = vld [vmem:[%s1722 + $0x38] sm:$0xff]
        %v1731 = vld [vmem:[%s1722 + $0x40] sm:$0xff]
        %v1732 = vld [vmem:[%s1722 + $0x48] sm:$0xff]
        %v1733 = vld [vmem:[%s1722 + $0x50] sm:$0xff]
        %v1734 = vld [vmem:[%s1722 + $0x58] sm:$0xff]
        %v1735 = vld [vmem:[%s1722 + $0x60] sm:$0xff]
        %v1736 = vld [vmem:[%s1722 + $0x68] sm:$0xff]
        %v1738 = vrot.slane %v1497, 1
        %v1753 = vunpack.c.l.b16 %v1723
        %v1754 = vunpack.c.h.b16 %v1723
        %v1755 = vunpack.c.l.b16 %v1724
        %v1756 = vunpack.c.h.b16 %v1724
        %v1757 = vunpack.c.l.b16 %v1725
        %v1758 = vunpack.c.h.b16 %v1725
        %v1759 = vunpack.c.l.b16 %v1726
        %v1760 = vunpack.c.h.b16 %v1726
        %v1761 = vunpack.c.l.b16 %v1727
        %v1762 = vunpack.c.h.b16 %v1727
        %v1763 = vunpack.c.l.b16 %v1728
        %v1764 = vunpack.c.h.b16 %v1728
        %v1765 = vunpack.c.l.b16 %v1729
        %v1766 = vunpack.c.h.b16 %v1729
        %v1767 = vunpack.c.l.b16 %v1730
        %v1768 = vunpack.c.h.b16 %v1730
        %v1769 = vunpack.c.l.b16 %v1731
        %v1770 = vunpack.c.h.b16 %v1731
        %v1771 = vunpack.c.l.b16 %v1732
        %v1772 = vunpack.c.h.b16 %v1732
        %v1773 = vunpack.c.l.b16 %v1733
        %v1774 = vunpack.c.h.b16 %v1733
        %v1775 = vunpack.c.l.b16 %v1734
        %v1776 = vunpack.c.h.b16 %v1734
        %v1777 = vunpack.c.l.b16 %v1735
        %v1778 = vunpack.c.h.b16 %v1735
        %v1779 = vunpack.c.l.b16 %v1736
        %v1780 = vunpack.c.h.b16 %v1736
        %v1781 = vpack.c.b16 %v1755, %v1753
        %v1782 = vpack.c.b16 %v1756, %v1754
        %v1783 = vpack.c.b16 %v1759, %v1757
        %v1784 = vpack.c.b16 %v1760, %v1758
        %v1785 = vpack.c.b16 %v1763, %v1761
        %v1786 = vpack.c.b16 %v1764, %v1762
        %v1787 = vpack.c.b16 %v1767, %v1765
        %v1788 = vpack.c.b16 %v1768, %v1766
        %v1789 = vpack.c.b16 %v1771, %v1769
        %v1790 = vpack.c.b16 %v1772, %v1770
        %v1791 = vpack.c.b16 %v1775, %v1773
        %v1792 = vpack.c.b16 %v1776, %v1774
        %v1793 = vpack.c.b16 %v1779, %v1777
        %v1794 = vpack.c.b16 %v1780, %v1778
        %v1810 = vsel %vm1590, %v1738, 0
        %1812 = vmatpush.bf16.msra.mxu0 0
        %1813 = vmatpush.bf16.msra.mxu0 %v1793
        %1814 = vmatpush.bf16.msra.mxu0 %v1791
        %1815 = vmatpush.bf16.msra.mxu0 %v1789
        %1816 = vmatpush.bf16.msra.mxu0 %v1787
        %1817 = vmatpush.bf16.msra.mxu0 %v1785
        %1818 = vmatpush.bf16.msra.mxu0 %v1783
        %1819 = vmatpush.bf16.msra.mxu0 %v1781
        %1820 = vmatmul.bf16.gmra.mxu0 %v1810
        %v1821 = vpop.f32.mrf.mxu0
        %v1822 = vadd.f32 0.0, %v1821
        %v1823 = vpop.f32.mrf.mxu0
        %v1824 = vadd.f32 0.0, %v1823
        %1825 = vdwg.mxu0
        %1826 = vmatpush.bf16.msra.mxu0 0
        %1827 = vmatpush.bf16.msra.mxu0 %v1794
        %1828 = vmatpush.bf16.msra.mxu0 %v1792
        %1829 = vmatpush.bf16.msra.mxu0 %v1790
        %1830 = vmatpush.bf16.msra.mxu0 %v1788
        %1831 = vmatpush.bf16.msra.mxu0 %v1786
        %1832 = vmatpush.bf16.msra.mxu0 %v1784
        %1833 = vmatpush.bf16.msra.mxu0 %v1782
        %1834 = vmatmul.bf16.gmra.mxu0 %v1810
        %v1835 = vpop.f32.mrf.mxu0
        %v1836 = vadd.f32 0.0, %v1835
        %v1837 = vpop.f32.mrf.mxu0
        %v1838 = vadd.f32 0.0, %v1837
        %1839 = vdwg.mxu0
        %v1840 = vadd.f32 %v1704, %v1822
        %v1841 = vadd.f32 %v1718, %v1836
        %v1842 = vadd.f32 %v1706, %v1824
        %v1843 = vadd.f32 %v1720, %v1838
        %s1844 = scalar_lea.vmem %s7, 336
        %v1845 = vld [vmem:[%s1844] sm:$0xff]
        %v1846 = vld [vmem:[%s1844 + $0x8] sm:$0xff]
        %v1847 = vld [vmem:[%s1844 + $0x10] sm:$0xff]
        %v1848 = vld [vmem:[%s1844 + $0x18] sm:$0xff]
        %v1849 = vld [vmem:[%s1844 + $0x20] sm:$0xff]
        %v1850 = vld [vmem:[%s1844 + $0x28] sm:$0xff]
        %v1851 = vld [vmem:[%s1844 + $0x30] sm:$0xff]
        %v1852 = vld [vmem:[%s1844 + $0x38] sm:$0xff]
        %v1853 = vld [vmem:[%s1844 + $0x40] sm:$0xff]
        %v1854 = vld [vmem:[%s1844 + $0x48] sm:$0xff]
        %v1855 = vld [vmem:[%s1844 + $0x50] sm:$0xff]
        %v1856 = vld [vmem:[%s1844 + $0x58] sm:$0xff]
        %v1857 = vld [vmem:[%s1844 + $0x60] sm:$0xff]
        %v1858 = vld [vmem:[%s1844 + $0x68] sm:$0xff]
        %v1859 = vrot.slane %v1514, 1
        %v1860 = vrot.slane %v1516, 2
        %v1861 = vor.u32 %v1859, %v1860
        %v1876 = vunpack.c.l.b16 %v1845
        %v1877 = vunpack.c.h.b16 %v1845
        %v1878 = vunpack.c.l.b16 %v1846
        %v1879 = vunpack.c.h.b16 %v1846
        %v1880 = vunpack.c.l.b16 %v1847
        %v1881 = vunpack.c.h.b16 %v1847
        %v1882 = vunpack.c.l.b16 %v1848
        %v1883 = vunpack.c.h.b16 %v1848
        %v1884 = vunpack.c.l.b16 %v1849
        %v1885 = vunpack.c.h.b16 %v1849
        %v1886 = vunpack.c.l.b16 %v1850
        %v1887 = vunpack.c.h.b16 %v1850
        %v1888 = vunpack.c.l.b16 %v1851
        %v1889 = vunpack.c.h.b16 %v1851
        %v1890 = vunpack.c.l.b16 %v1852
        %v1891 = vunpack.c.h.b16 %v1852
        %v1892 = vunpack.c.l.b16 %v1853
        %v1893 = vunpack.c.h.b16 %v1853
        %v1894 = vunpack.c.l.b16 %v1854
        %v1895 = vunpack.c.h.b16 %v1854
        %v1896 = vunpack.c.l.b16 %v1855
        %v1897 = vunpack.c.h.b16 %v1855
        %v1898 = vunpack.c.l.b16 %v1856
        %v1899 = vunpack.c.h.b16 %v1856
        %v1900 = vunpack.c.l.b16 %v1857
        %v1901 = vunpack.c.h.b16 %v1857
        %v1902 = vunpack.c.l.b16 %v1858
        %v1903 = vunpack.c.h.b16 %v1858
        %v1904 = vpack.c.b16 %v1878, %v1876
        %v1905 = vpack.c.b16 %v1879, %v1877
        %v1906 = vpack.c.b16 %v1882, %v1880
        %v1907 = vpack.c.b16 %v1883, %v1881
        %v1908 = vpack.c.b16 %v1886, %v1884
        %v1909 = vpack.c.b16 %v1887, %v1885
        %v1910 = vpack.c.b16 %v1890, %v1888
        %v1911 = vpack.c.b16 %v1891, %v1889
        %v1912 = vpack.c.b16 %v1894, %v1892
        %v1913 = vpack.c.b16 %v1895, %v1893
        %v1914 = vpack.c.b16 %v1898, %v1896
        %v1915 = vpack.c.b16 %v1899, %v1897
        %v1916 = vpack.c.b16 %v1902, %v1900
        %v1917 = vpack.c.b16 %v1903, %v1901
        %v1933 = vsel %vm1590, %v1861, 0
        %1935 = vmatpush.bf16.msra.mxu0 0
        %1936 = vmatpush.bf16.msra.mxu0 %v1916
        %1937 = vmatpush.bf16.msra.mxu0 %v1914
        %1938 = vmatpush.bf16.msra.mxu0 %v1912
        %1939 = vmatpush.bf16.msra.mxu0 %v1910
        %1940 = vmatpush.bf16.msra.mxu0 %v1908
        %1941 = vmatpush.bf16.msra.mxu0 %v1906
        %1942 = vmatpush.bf16.msra.mxu0 %v1904
        %1943 = vmatmul.bf16.gmra.mxu0 %v1933
        %v1944 = vpop.f32.mrf.mxu0
        %v1945 = vadd.f32 0.0, %v1944
        %v1946 = vpop.f32.mrf.mxu0
        %v1947 = vadd.f32 0.0, %v1946
        %1948 = vdwg.mxu0
        %1949 = vmatpush.bf16.msra.mxu0 0
        %1950 = vmatpush.bf16.msra.mxu0 %v1917
        %1951 = vmatpush.bf16.msra.mxu0 %v1915
        %1952 = vmatpush.bf16.msra.mxu0 %v1913
        %1953 = vmatpush.bf16.msra.mxu0 %v1911
        %1954 = vmatpush.bf16.msra.mxu0 %v1909
        %1955 = vmatpush.bf16.msra.mxu0 %v1907
        %1956 = vmatpush.bf16.msra.mxu0 %v1905
        %1957 = vmatmul.bf16.gmra.mxu0 %v1933
        %v1958 = vpop.f32.mrf.mxu0
        %v1959 = vadd.f32 0.0, %v1958
        %v1960 = vpop.f32.mrf.mxu0
        %v1961 = vadd.f32 0.0, %v1960
        %1962 = vdwg.mxu0
        %v1963 = vadd.f32 %v1840, %v1945
        %v1964 = vadd.f32 %v1841, %v1959
        %v1965 = vadd.f32 %v1842, %v1947
        %v1966 = vadd.f32 %v1843, %v1961
        %s1967 = scalar_lea.vmem %s7, 448
        %v1968 = vld [vmem:[%s1967] sm:$0xff]
        %v1969 = vld [vmem:[%s1967 + $0x8] sm:$0xff]
        %v1970 = vld [vmem:[%s1967 + $0x10] sm:$0xff]
        %v1971 = vld [vmem:[%s1967 + $0x18] sm:$0xff]
        %v1972 = vld [vmem:[%s1967 + $0x20] sm:$0xff]
        %v1973 = vld [vmem:[%s1967 + $0x28] sm:$0xff]
        %v1974 = vld [vmem:[%s1967 + $0x30] sm:$0xff]
        %v1975 = vld [vmem:[%s1967 + $0x38] sm:$0xff]
        %v1976 = vld [vmem:[%s1967 + $0x40] sm:$0xff]
        %v1977 = vld [vmem:[%s1967 + $0x48] sm:$0xff]
        %v1978 = vld [vmem:[%s1967 + $0x50] sm:$0xff]
        %v1979 = vld [vmem:[%s1967 + $0x58] sm:$0xff]
        %v1980 = vld [vmem:[%s1967 + $0x60] sm:$0xff]
        %v1981 = vld [vmem:[%s1967 + $0x68] sm:$0xff]
        %v1982 = vrot.slane %v1497, 2
        %v1997 = vunpack.c.l.b16 %v1968
        %v1998 = vunpack.c.h.b16 %v1968
        %v1999 = vunpack.c.l.b16 %v1969
        %v2000 = vunpack.c.h.b16 %v1969
        %v2001 = vunpack.c.l.b16 %v1970
        %v2002 = vunpack.c.h.b16 %v1970
        %v2003 = vunpack.c.l.b16 %v1971
        %v2004 = vunpack.c.h.b16 %v1971
        %v2005 = vunpack.c.l.b16 %v1972
        %v2006 = vunpack.c.h.b16 %v1972
        %v2007 = vunpack.c.l.b16 %v1973
        %v2008 = vunpack.c.h.b16 %v1973
        %v2009 = vunpack.c.l.b16 %v1974
        %v2010 = vunpack.c.h.b16 %v1974
        %v2011 = vunpack.c.l.b16 %v1975
        %v2012 = vunpack.c.h.b16 %v1975
        %v2013 = vunpack.c.l.b16 %v1976
        %v2014 = vunpack.c.h.b16 %v1976
        %v2015 = vunpack.c.l.b16 %v1977
        %v2016 = vunpack.c.h.b16 %v1977
        %v2017 = vunpack.c.l.b16 %v1978
        %v2018 = vunpack.c.h.b16 %v1978
        %v2019 = vunpack.c.l.b16 %v1979
        %v2020 = vunpack.c.h.b16 %v1979
        %v2021 = vunpack.c.l.b16 %v1980
        %v2022 = vunpack.c.h.b16 %v1980
        %v2023 = vunpack.c.l.b16 %v1981
        %v2024 = vunpack.c.h.b16 %v1981
        %v2025 = vpack.c.b16 %v1999, %v1997
        %v2026 = vpack.c.b16 %v2000, %v1998
        %v2027 = vpack.c.b16 %v2003, %v2001
        %v2028 = vpack.c.b16 %v2004, %v2002
        %v2029 = vpack.c.b16 %v2007, %v2005
        %v2030 = vpack.c.b16 %v2008, %v2006
        %v2031 = vpack.c.b16 %v2011, %v2009
        %v2032 = vpack.c.b16 %v2012, %v2010
        %v2033 = vpack.c.b16 %v2015, %v2013
        %v2034 = vpack.c.b16 %v2016, %v2014
        %v2035 = vpack.c.b16 %v2019, %v2017
        %v2036 = vpack.c.b16 %v2020, %v2018
        %v2037 = vpack.c.b16 %v2023, %v2021
        %v2038 = vpack.c.b16 %v2024, %v2022
        %v2054 = vsel %vm1590, %v1982, 0
        %2056 = vmatpush.bf16.msra.mxu0 0
        %2057 = vmatpush.bf16.msra.mxu0 %v2037
        %2058 = vmatpush.bf16.msra.mxu0 %v2035
        %2059 = vmatpush.bf16.msra.mxu0 %v2033
        %2060 = vmatpush.bf16.msra.mxu0 %v2031
        %2061 = vmatpush.bf16.msra.mxu0 %v2029
        %2062 = vmatpush.bf16.msra.mxu0 %v2027
        %2063 = vmatpush.bf16.msra.mxu0 %v2025
        %2064 = vmatmul.bf16.gmra.mxu0 %v2054
        %v2065 = vpop.f32.mrf.mxu0
        %v2066 = vadd.f32 0.0, %v2065
        %v2067 = vpop.f32.mrf.mxu0
        %v2068 = vadd.f32 0.0, %v2067
        %2069 = vdwg.mxu0
        %2070 = vmatpush.bf16.msra.mxu0 0
        %2071 = vmatpush.bf16.msra.mxu0 %v2038
        %2072 = vmatpush.bf16.msra.mxu0 %v2036
        %2073 = vmatpush.bf16.msra.mxu0 %v2034
        %2074 = vmatpush.bf16.msra.mxu0 %v2032
        %2075 = vmatpush.bf16.msra.mxu0 %v2030
        %2076 = vmatpush.bf16.msra.mxu0 %v2028
        %2077 = vmatpush.bf16.msra.mxu0 %v2026
        %2078 = vmatmul.bf16.gmra.mxu0 %v2054
        %v2079 = vpop.f32.mrf.mxu0
        %v2080 = vadd.f32 0.0, %v2079
        %v2081 = vpop.f32.mrf.mxu0
        %v2082 = vadd.f32 0.0, %v2081
        %2083 = vdwg.mxu0
        %v2084 = vadd.f32 %v1963, %v2066
        %v2085 = vadd.f32 %v1964, %v2080
        %v2086 = vadd.f32 %v1965, %v2068
        %v2087 = vadd.f32 %v1966, %v2082
        %v2088 = vld [vmem:[#allocation5] sm:$0x3]
        %v2090 = vperm.slane %v2088, 0
        %v2091 = vperm.slane %v2088, 1
        %v2094 = vadd.f32 %v2084, %v2090
        %v2095 = vadd.f32 %v2085, %v2091
        %v2096 = vadd.f32 %v2086, %v2090
        %v2097 = vadd.f32 %v2087, %v2091
        %v2098 = vmax.f32 %v2094, 0.0
        %v2099 = vmax.f32 %v2095, 0.0
        %v2100 = vmax.f32 %v2096, 0.0
        %v2101 = vmax.f32 %v2097, 0.0
        %v2102 = vpack.c.bf16 %v2100, %v2098
        %v2103 = vpack.c.bf16 %v2101, %v2099
        %v2104 = vld [vmem:[%s9] sm:$0x7]
        %vm2105 = vcmask 80896
        %v2107 = vsel %vm2105, %v2104, 0
        %vm2109 = vcmask 1044480
        %v2111 = vsel %vm2109, %v2102, 0
        %v2114 = vsel %vm2109, %v2103, 0
        %2116 = vmatpush.bf16.msra.mxu0 0
        %2117 = vmatpush.bf16.msra.mxu0 0
        %2118 = vmatpush.bf16.msra.mxu0 0
        %2119 = vmatpush.bf16.msra.mxu0 0
        %2120 = vmatpush.bf16.msra.mxu0 0
        %2121 = vmatpush.bf16.msra.mxu0 0
        %2122 = vmatpush.bf16.msra.mxu0 0
        %2123 = vmatpush.bf16.msra.mxu0 %v2111
        %2124 = vmatmul.bf16.gmra.mxu0 %v2107
        %v2125 = vpop.f32.mrf.mxu0
        %v2126 = vadd.f32 0.0, %v2125
        %v2127 = vpop.f32.mrf.mxu0
        %2128 = vdwg.mxu0
        %2129 = vmatpush.bf16.msra.mxu0 0
        %2130 = vmatpush.bf16.msra.mxu0 0
        %2131 = vmatpush.bf16.msra.mxu0 0
        %2132 = vmatpush.bf16.msra.mxu0 0
        %2133 = vmatpush.bf16.msra.mxu0 0
        %2134 = vmatpush.bf16.msra.mxu0 0
        %2135 = vmatpush.bf16.msra.mxu0 0
        %2136 = vmatpush.bf16.msra.mxu0 %v2114
        %2137 = vmatmul.bf16.gmra.mxu0 %v2107
        %v2138 = vpop.f32.mrf.mxu0
        %v2139 = vadd.f32 0.0, %v2138
        %v2140 = vpop.f32.mrf.mxu0
        %2141 = vdwg.mxu0
        %v2142 = vld [vmem:[%s10] sm:$0x7]
        %v2144 = vsel %vm2105, %v2142, 0
        %2146 = vmatpush.bf16.msra.mxu0 0
        %2147 = vmatpush.bf16.msra.mxu0 0
        %2148 = vmatpush.bf16.msra.mxu0 0
        %2149 = vmatpush.bf16.msra.mxu0 0
        %2150 = vmatpush.bf16.msra.mxu0 0
        %2151 = vmatpush.bf16.msra.mxu0 0
        %2152 = vmatpush.bf16.msra.mxu0 0
        %2153 = vmatpush.bf16.msra.mxu0 %v2111
        %2154 = vmatmul.bf16.gmra.mxu0 %v2144
        %v2155 = vpop.f32.mrf.mxu0
        %v2156 = vadd.f32 0.0, %v2155
        %v2157 = vpop.f32.mrf.mxu0
        %2158 = vdwg.mxu0
        %2159 = vmatpush.bf16.msra.mxu0 0
        %2160 = vmatpush.bf16.msra.mxu0 0
        %2161 = vmatpush.bf16.msra.mxu0 0
        %2162 = vmatpush.bf16.msra.mxu0 0
        %2163 = vmatpush.bf16.msra.mxu0 0
        %2164 = vmatpush.bf16.msra.mxu0 0
        %2165 = vmatpush.bf16.msra.mxu0 0
        %2166 = vmatpush.bf16.msra.mxu0 %v2114
        %2167 = vmatmul.bf16.gmra.mxu0 %v2144
        %v2168 = vpop.f32.mrf.mxu0
        %v2169 = vadd.f32 0.0, %v2168
        %v2170 = vpop.f32.mrf.mxu0
        %2171 = vdwg.mxu0
        %v2172 = vmax.f32 %v2126, %v2156
        %v2173 = vmax.f32 %v2139, %v2169
        %v2174 = vpack.c.bf16 %v2172, %v2172
        %v2175 = vpack.c.bf16 %v2173, %v2173
        %v2176 = vld [vmem:[%s11] sm:$0xf]
        %v2177 = vld [vmem:[%s11 + $0x4] sm:$0xf]
        %v2178 = vld [vmem:[%s11 + $0x8] sm:$0xf]
        %v2179 = vld [vmem:[%s11 + $0xc] sm:$0xf]
        %v2180 = vld [vmem:[%s11 + $0x10] sm:$0xf]
        %v2181 = vld [vmem:[%s11 + $0x14] sm:$0xf]
        %v2182 = vld [vmem:[%s11 + $0x18] sm:$0xf]
        %v2183 = vld [vmem:[%s11 + $0x1c] sm:$0xf]
        %v2184 = vld [vmem:[%s11 + $0x20] sm:$0xf]
        %v2185 = vld [vmem:[%s11 + $0x24] sm:$0xf]
        %v2186 = vld [vmem:[%s11 + $0x28] sm:$0xf]
        %v2187 = vld [vmem:[%s11 + $0x2c] sm:$0xf]
        %v2188 = vld [vmem:[%s11 + $0x30] sm:$0xf]
        %v2189 = vld [vmem:[%s11 + $0x34] sm:$0xf]
        %v2190 = vld [vmem:[%s11 + $0x38] sm:$0xf]
        %v2191 = vld [vmem:[%s11 + $0x3c] sm:$0xf]
        %v2192 = vld [vmem:[%s11 + $0x40] sm:$0xf]
        %v2193 = vld [vmem:[%s11 + $0x44] sm:$0xf]
        %v2194 = vld [vmem:[%s11 + $0x48] sm:$0xf]
        %v2195 = vld [vmem:[%s11 + $0x4c] sm:$0xf]
        %v2216 = vunpack.c.l.b16 %v2176
        %v2217 = vunpack.c.l.b16 %v2177
        %v2218 = vunpack.c.l.b16 %v2178
        %v2219 = vunpack.c.l.b16 %v2179
        %v2220 = vunpack.c.l.b16 %v2180
        %v2221 = vunpack.c.l.b16 %v2181
        %v2222 = vunpack.c.l.b16 %v2182
        %v2223 = vunpack.c.l.b16 %v2183
        %v2224 = vunpack.c.l.b16 %v2184
        %v2225 = vunpack.c.l.b16 %v2185
        %v2226 = vunpack.c.l.b16 %v2186
        %v2227 = vunpack.c.l.b16 %v2187
        %v2228 = vunpack.c.l.b16 %v2188
        %v2229 = vunpack.c.l.b16 %v2189
        %v2230 = vunpack.c.l.b16 %v2190
        %v2231 = vunpack.c.l.b16 %v2191
        %v2232 = vunpack.c.l.b16 %v2192
        %v2233 = vunpack.c.l.b16 %v2193
        %v2234 = vunpack.c.l.b16 %v2194
        %v2235 = vunpack.c.l.b16 %v2195
        %v2236 = vpack.c.b16 %v2217, %v2216
        %v2237 = vpack.c.b16 %v2219, %v2218
        %v2238 = vpack.c.b16 %v2221, %v2220
        %v2239 = vpack.c.b16 %v2223, %v2222
        %v2240 = vpack.c.b16 %v2225, %v2224
        %v2241 = vpack.c.b16 %v2227, %v2226
        %v2242 = vpack.c.b16 %v2229, %v2228
        %v2243 = vpack.c.b16 %v2231, %v2230
        %v2244 = vpack.c.b16 %v2233, %v2232
        %v2245 = vpack.c.b16 %v2235, %v2234
        %v2257 = vsel %vm725, %v2175, 0
        %2259 = vmatpush.bf16.msra.mxu0 %v2243
        %2260 = vmatpush.bf16.msra.mxu0 %v2242
        %2261 = vmatpush.bf16.msra.mxu0 %v2241
        %2262 = vmatpush.bf16.msra.mxu0 %v2240
        %2263 = vmatpush.bf16.msra.mxu0 %v2239
        %2264 = vmatpush.bf16.msra.mxu0 %v2238
        %2265 = vmatpush.bf16.msra.mxu0 %v2237
        %2266 = vmatpush.bf16.msra.mxu0 %v2236
        %2267 = vmatmul.bf16.gmra.mxu0 %v2174
        %v2268 = vpop.f32.mrf.mxu0
        %v2269 = vadd.f32 0.0, %v2268
        %v2270 = vpop.f32.mrf.mxu0
        %2271 = vdwg.mxu0
        %2272 = vmatpush.bf16.msra.mxu0 0
        %2273 = vmatpush.bf16.msra.mxu0 0
        %2274 = vmatpush.bf16.msra.mxu0 0
        %2275 = vmatpush.bf16.msra.mxu0 0
        %2276 = vmatpush.bf16.msra.mxu0 0
        %2277 = vmatpush.bf16.msra.mxu0 0
        %2278 = vmatpush.bf16.msra.mxu0 %v2245
        %2279 = vmatpush.bf16.msra.mxu0 %v2244
        %2280 = vmatmul.bf16.gmra.mxu0 %v2257
        %v2281 = vpop.f32.mrf.mxu0
        %v2282 = vadd.f32 %v2269, %v2281
        %v2283 = vpop.f32.mrf.mxu0
        %2284 = vdwg.mxu0
        %v2285 = vld [vmem:[%s12] sm:$0xf]
        %v2286 = vld [vmem:[%s12 + $0x4] sm:$0xf]
        %v2287 = vld [vmem:[%s12 + $0x8] sm:$0xf]
        %v2288 = vld [vmem:[%s12 + $0xc] sm:$0xf]
        %v2289 = vld [vmem:[%s12 + $0x10] sm:$0xf]
        %v2290 = vld [vmem:[%s12 + $0x14] sm:$0xf]
        %v2291 = vld [vmem:[%s12 + $0x18] sm:$0xf]
        %v2292 = vld [vmem:[%s12 + $0x1c] sm:$0xf]
        %v2293 = vld [vmem:[%s12 + $0x20] sm:$0xf]
        %v2294 = vld [vmem:[%s12 + $0x24] sm:$0xf]
        %v2295 = vld [vmem:[%s12 + $0x28] sm:$0xf]
        %v2296 = vld [vmem:[%s12 + $0x2c] sm:$0xf]
        %v2297 = vld [vmem:[%s12 + $0x30] sm:$0xf]
        %v2298 = vld [vmem:[%s12 + $0x34] sm:$0xf]
        %v2299 = vld [vmem:[%s12 + $0x38] sm:$0xf]
        %v2300 = vld [vmem:[%s12 + $0x3c] sm:$0xf]
        %v2301 = vld [vmem:[%s12 + $0x40] sm:$0xf]
        %v2302 = vld [vmem:[%s12 + $0x44] sm:$0xf]
        %v2303 = vld [vmem:[%s12 + $0x48] sm:$0xf]
        %v2304 = vld [vmem:[%s12 + $0x4c] sm:$0xf]
        %v2325 = vunpack.c.l.b16 %v2285
        %v2326 = vunpack.c.l.b16 %v2286
        %v2327 = vunpack.c.l.b16 %v2287
        %v2328 = vunpack.c.l.b16 %v2288
        %v2329 = vunpack.c.l.b16 %v2289
        %v2330 = vunpack.c.l.b16 %v2290
        %v2331 = vunpack.c.l.b16 %v2291
        %v2332 = vunpack.c.l.b16 %v2292
        %v2333 = vunpack.c.l.b16 %v2293
        %v2334 = vunpack.c.l.b16 %v2294
        %v2335 = vunpack.c.l.b16 %v2295
        %v2336 = vunpack.c.l.b16 %v2296
        %v2337 = vunpack.c.l.b16 %v2297
        %v2338 = vunpack.c.l.b16 %v2298
        %v2339 = vunpack.c.l.b16 %v2299
        %v2340 = vunpack.c.l.b16 %v2300
        %v2341 = vunpack.c.l.b16 %v2301
        %v2342 = vunpack.c.l.b16 %v2302
        %v2343 = vunpack.c.l.b16 %v2303
        %v2344 = vunpack.c.l.b16 %v2304
        %v2345 = vpack.c.b16 %v2326, %v2325
        %v2346 = vpack.c.b16 %v2328, %v2327
        %v2347 = vpack.c.b16 %v2330, %v2329
        %v2348 = vpack.c.b16 %v2332, %v2331
        %v2349 = vpack.c.b16 %v2334, %v2333
        %v2350 = vpack.c.b16 %v2336, %v2335
        %v2351 = vpack.c.b16 %v2338, %v2337
        %v2352 = vpack.c.b16 %v2340, %v2339
        %v2353 = vpack.c.b16 %v2342, %v2341
        %v2354 = vpack.c.b16 %v2344, %v2343
        %2365 = vmatpush.bf16.msra.mxu0 %v2352
        %2366 = vmatpush.bf16.msra.mxu0 %v2351
        %2367 = vmatpush.bf16.msra.mxu0 %v2350
        %2368 = vmatpush.bf16.msra.mxu0 %v2349
        %2369 = vmatpush.bf16.msra.mxu0 %v2348
        %2370 = vmatpush.bf16.msra.mxu0 %v2347
        %2371 = vmatpush.bf16.msra.mxu0 %v2346
        %2372 = vmatpush.bf16.msra.mxu0 %v2345
        %2373 = vmatmul.bf16.gmra.mxu0 %v2174
        %v2374 = vpop.f32.mrf.mxu0
        %v2375 = vadd.f32 0.0, %v2374
        %v2376 = vpop.f32.mrf.mxu0
        %2377 = vdwg.mxu0
        %2378 = vmatpush.bf16.msra.mxu0 0
        %2379 = vmatpush.bf16.msra.mxu0 0
        %2380 = vmatpush.bf16.msra.mxu0 0
        %2381 = vmatpush.bf16.msra.mxu0 0
        %2382 = vmatpush.bf16.msra.mxu0 0
        %2383 = vmatpush.bf16.msra.mxu0 0
        %2384 = vmatpush.bf16.msra.mxu0 %v2354
        %2385 = vmatpush.bf16.msra.mxu0 %v2353
        %2386 = vmatmul.bf16.gmra.mxu0 %v2257
        %v2387 = vpop.f32.mrf.mxu0
        %v2388 = vadd.f32 %v2375, %v2387
        %v2389 = vpop.f32.mrf.mxu0
        %2390 = vdwg.mxu0
        %v2391 = vmax.f32 %v2282, %v2388
        %v2392 = vld [vmem:[%s13] sm:$0xf]
        %v2393 = vld [vmem:[%s13 + $0x4] sm:$0xf]
        %v2394 = vld [vmem:[%s13 + $0x8] sm:$0xf]
        %v2395 = vld [vmem:[%s13 + $0xc] sm:$0xf]
        %v2396 = vld [vmem:[%s13 + $0x10] sm:$0xf]
        %v2397 = vld [vmem:[%s13 + $0x14] sm:$0xf]
        %v2398 = vld [vmem:[%s13 + $0x18] sm:$0xf]
        %v2399 = vld [vmem:[%s13 + $0x1c] sm:$0xf]
        %v2400 = vld [vmem:[%s13 + $0x20] sm:$0xf]
        %v2401 = vld [vmem:[%s13 + $0x24] sm:$0xf]
        %v2402 = vpack.c.bf16 %v2391, %v2391
        %s2403 = scalar_lea.vmem %s13, 40
        %v2404 = vld [vmem:[%s2403] sm:$0xf]
        %v2405 = vld [vmem:[%s2403 + $0x4] sm:$0xf]
        %v2406 = vld [vmem:[%s2403 + $0x8] sm:$0xf]
        %v2407 = vld [vmem:[%s2403 + $0xc] sm:$0xf]
        %v2408 = vld [vmem:[%s2403 + $0x10] sm:$0xf]
        %v2409 = vld [vmem:[%s2403 + $0x14] sm:$0xf]
        %v2410 = vld [vmem:[%s2403 + $0x18] sm:$0xf]
        %v2411 = vld [vmem:[%s2403 + $0x1c] sm:$0xf]
        %v2412 = vld [vmem:[%s2403 + $0x20] sm:$0xf]
        %v2413 = vld [vmem:[%s2403 + $0x24] sm:$0xf]
        %v2415 = vshrl.u32 %v2402, 16
        %v2427 = vunpack.c.l.b16 %v2404
        %v2428 = vunpack.c.l.b16 %v2405
        %v2429 = vunpack.c.l.b16 %v2406
        %v2430 = vunpack.c.l.b16 %v2407
        %v2431 = vunpack.c.l.b16 %v2408
        %v2432 = vunpack.c.l.b16 %v2409
        %v2433 = vunpack.c.l.b16 %v2410
        %v2434 = vunpack.c.l.b16 %v2411
        %v2435 = vunpack.c.l.b16 %v2412
        %v2436 = vunpack.c.l.b16 %v2413
        %v2437 = vpack.c.b16 %v2428, %v2427
        %v2438 = vpack.c.b16 %v2430, %v2429
        %v2439 = vpack.c.b16 %v2432, %v2431
        %v2440 = vpack.c.b16 %v2434, %v2433
        %v2441 = vpack.c.b16 %v2436, %v2435
        %vm2447 = vcmask 654336
        %v2449 = vsel %vm2447, %v2415, 0
        %2451 = vmatpush.bf16.msra.mxu0 0
        %2452 = vmatpush.bf16.msra.mxu0 0
        %2453 = vmatpush.bf16.msra.mxu0 0
        %2454 = vmatpush.bf16.msra.mxu0 %v2441
        %2455 = vmatpush.bf16.msra.mxu0 %v2440
        %2456 = vmatpush.bf16.msra.mxu0 %v2439
        %2457 = vmatpush.bf16.msra.mxu0 %v2438
        %2458 = vmatpush.bf16.msra.mxu0 %v2437
        %2459 = vmatmul.bf16.gmra.mxu0 %v2449
        %v2460 = vpop.f32.mrf.mxu0
        %v2461 = vadd.f32 0.0, %v2460
        %v2462 = vpop.f32.mrf.mxu0
        %2463 = vdwg.mxu0
        %v2474 = vunpack.c.l.b16 %v2392
        %v2475 = vunpack.c.l.b16 %v2393
        %v2476 = vunpack.c.l.b16 %v2394
        %v2477 = vunpack.c.l.b16 %v2395
        %v2478 = vunpack.c.l.b16 %v2396
        %v2479 = vunpack.c.l.b16 %v2397
        %v2480 = vunpack.c.l.b16 %v2398
        %v2481 = vunpack.c.l.b16 %v2399
        %v2482 = vunpack.c.l.b16 %v2400
        %v2483 = vunpack.c.l.b16 %v2401
        %v2484 = vpack.c.b16 %v2475, %v2474
        %v2485 = vpack.c.b16 %v2477, %v2476
        %v2486 = vpack.c.b16 %v2479, %v2478
        %v2487 = vpack.c.b16 %v2481, %v2480
        %v2488 = vpack.c.b16 %v2483, %v2482
        %v2494 = vsel %vm2447, %v2402, 0
        %2496 = vmatpush.bf16.msra.mxu0 0
        %2497 = vmatpush.bf16.msra.mxu0 0
        %2498 = vmatpush.bf16.msra.mxu0 0
        %2499 = vmatpush.bf16.msra.mxu0 %v2488
        %2500 = vmatpush.bf16.msra.mxu0 %v2487
        %2501 = vmatpush.bf16.msra.mxu0 %v2486
        %2502 = vmatpush.bf16.msra.mxu0 %v2485
        %2503 = vmatpush.bf16.msra.mxu0 %v2484
        %2504 = vmatmul.bf16.gmra.mxu0 %v2494
        %v2505 = vpop.f32.mrf.mxu0
        %v2506 = vadd.f32 %v2461, %v2505
        %v2507 = vpop.f32.mrf.mxu0
        %2508 = vdwg.mxu0
        %s2509 = scalar_lea.vmem %s13, 80
        %v2510 = vld [vmem:[%s2509] sm:$0xf]
        %v2511 = vld [vmem:[%s2509 + $0x4] sm:$0xf]
        %v2512 = vld [vmem:[%s2509 + $0x8] sm:$0xf]
        %v2513 = vld [vmem:[%s2509 + $0xc] sm:$0xf]
        %v2514 = vld [vmem:[%s2509 + $0x10] sm:$0xf]
        %v2515 = vld [vmem:[%s2509 + $0x14] sm:$0xf]
        %v2516 = vld [vmem:[%s2509 + $0x18] sm:$0xf]
        %v2517 = vld [vmem:[%s2509 + $0x1c] sm:$0xf]
        %v2518 = vld [vmem:[%s2509 + $0x20] sm:$0xf]
        %v2519 = vld [vmem:[%s2509 + $0x24] sm:$0xf]
        %v2521 = vrot.slane %v2402, 1
        %v2532 = vunpack.c.l.b16 %v2510
        %v2533 = vunpack.c.l.b16 %v2511
        %v2534 = vunpack.c.l.b16 %v2512
        %v2535 = vunpack.c.l.b16 %v2513
        %v2536 = vunpack.c.l.b16 %v2514
        %v2537 = vunpack.c.l.b16 %v2515
        %v2538 = vunpack.c.l.b16 %v2516
        %v2539 = vunpack.c.l.b16 %v2517
        %v2540 = vunpack.c.l.b16 %v2518
        %v2541 = vunpack.c.l.b16 %v2519
        %v2542 = vpack.c.b16 %v2533, %v2532
        %v2543 = vpack.c.b16 %v2535, %v2534
        %v2544 = vpack.c.b16 %v2537, %v2536
        %v2545 = vpack.c.b16 %v2539, %v2538
        %v2546 = vpack.c.b16 %v2541, %v2540
        %v2553 = vsel %vm2447, %v2521, 0
        %2555 = vmatpush.bf16.msra.mxu0 0
        %2556 = vmatpush.bf16.msra.mxu0 0
        %2557 = vmatpush.bf16.msra.mxu0 0
        %2558 = vmatpush.bf16.msra.mxu0 %v2546
        %2559 = vmatpush.bf16.msra.mxu0 %v2545
        %2560 = vmatpush.bf16.msra.mxu0 %v2544
        %2561 = vmatpush.bf16.msra.mxu0 %v2543
        %2562 = vmatpush.bf16.msra.mxu0 %v2542
        %2563 = vmatmul.bf16.gmra.mxu0 %v2553
        %v2564 = vpop.f32.mrf.mxu0
        %v2565 = vadd.f32 0.0, %v2564
        %v2566 = vpop.f32.mrf.mxu0
        %2567 = vdwg.mxu0
        %v2568 = vadd.f32 %v2506, %v2565
        %s2569 = scalar_lea.vmem %s13, 120
        %v2570 = vld [vmem:[%s2569] sm:$0xf]
        %v2571 = vld [vmem:[%s2569 + $0x4] sm:$0xf]
        %v2572 = vld [vmem:[%s2569 + $0x8] sm:$0xf]
        %v2573 = vld [vmem:[%s2569 + $0xc] sm:$0xf]
        %v2574 = vld [vmem:[%s2569 + $0x10] sm:$0xf]
        %v2575 = vld [vmem:[%s2569 + $0x14] sm:$0xf]
        %v2576 = vld [vmem:[%s2569 + $0x18] sm:$0xf]
        %v2577 = vld [vmem:[%s2569 + $0x1c] sm:$0xf]
        %v2578 = vld [vmem:[%s2569 + $0x20] sm:$0xf]
        %v2579 = vld [vmem:[%s2569 + $0x24] sm:$0xf]
        %v2580 = vrot.slane %v2415, 1
        %v2591 = vunpack.c.l.b16 %v2570
        %v2592 = vunpack.c.l.b16 %v2571
        %v2593 = vunpack.c.l.b16 %v2572
        %v2594 = vunpack.c.l.b16 %v2573
        %v2595 = vunpack.c.l.b16 %v2574
        %v2596 = vunpack.c.l.b16 %v2575
        %v2597 = vunpack.c.l.b16 %v2576
        %v2598 = vunpack.c.l.b16 %v2577
        %v2599 = vunpack.c.l.b16 %v2578
        %v2600 = vunpack.c.l.b16 %v2579
        %v2601 = vpack.c.b16 %v2592, %v2591
        %v2602 = vpack.c.b16 %v2594, %v2593
        %v2603 = vpack.c.b16 %v2596, %v2595
        %v2604 = vpack.c.b16 %v2598, %v2597
        %v2605 = vpack.c.b16 %v2600, %v2599
        %v2612 = vsel %vm2447, %v2580, 0
        %2614 = vmatpush.bf16.msra.mxu0 0
        %2615 = vmatpush.bf16.msra.mxu0 0
        %2616 = vmatpush.bf16.msra.mxu0 0
        %2617 = vmatpush.bf16.msra.mxu0 %v2605
        %2618 = vmatpush.bf16.msra.mxu0 %v2604
        %2619 = vmatpush.bf16.msra.mxu0 %v2603
        %2620 = vmatpush.bf16.msra.mxu0 %v2602
        %2621 = vmatpush.bf16.msra.mxu0 %v2601
        %2622 = vmatmul.bf16.gmra.mxu0 %v2612
        %v2623 = vpop.f32.mrf.mxu0
        %v2624 = vadd.f32 0.0, %v2623
        %v2625 = vpop.f32.mrf.mxu0
        %2626 = vdwg.mxu0
        %v2627 = vadd.f32 %v2568, %v2624
        %s2628 = scalar_lea.vmem %s13, 160
        %v2629 = vld [vmem:[%s2628] sm:$0xf]
        %v2630 = vld [vmem:[%s2628 + $0x4] sm:$0xf]
        %v2631 = vld [vmem:[%s2628 + $0x8] sm:$0xf]
        %v2632 = vld [vmem:[%s2628 + $0xc] sm:$0xf]
        %v2633 = vld [vmem:[%s2628 + $0x10] sm:$0xf]
        %v2634 = vld [vmem:[%s2628 + $0x14] sm:$0xf]
        %v2635 = vld [vmem:[%s2628 + $0x18] sm:$0xf]
        %v2636 = vld [vmem:[%s2628 + $0x1c] sm:$0xf]
        %v2637 = vld [vmem:[%s2628 + $0x20] sm:$0xf]
        %v2638 = vld [vmem:[%s2628 + $0x24] sm:$0xf]
        %v2639 = vrot.slane %v2402, 2
        %v2650 = vunpack.c.l.b16 %v2629
        %v2651 = vunpack.c.l.b16 %v2630
        %v2652 = vunpack.c.l.b16 %v2631
        %v2653 = vunpack.c.l.b16 %v2632
        %v2654 = vunpack.c.l.b16 %v2633
        %v2655 = vunpack.c.l.b16 %v2634
        %v2656 = vunpack.c.l.b16 %v2635
        %v2657 = vunpack.c.l.b16 %v2636
        %v2658 = vunpack.c.l.b16 %v2637
        %v2659 = vunpack.c.l.b16 %v2638
        %v2660 = vpack.c.b16 %v2651, %v2650
        %v2661 = vpack.c.b16 %v2653, %v2652
        %v2662 = vpack.c.b16 %v2655, %v2654
        %v2663 = vpack.c.b16 %v2657, %v2656
        %v2664 = vpack.c.b16 %v2659, %v2658
        %v2671 = vsel %vm2447, %v2639, 0
        %2673 = vmatpush.bf16.msra.mxu0 0
        %2674 = vmatpush.bf16.msra.mxu0 0
        %2675 = vmatpush.bf16.msra.mxu0 0
        %2676 = vmatpush.bf16.msra.mxu0 %v2664
        %2677 = vmatpush.bf16.msra.mxu0 %v2663
        %2678 = vmatpush.bf16.msra.mxu0 %v2662
        %2679 = vmatpush.bf16.msra.mxu0 %v2661
        %2680 = vmatpush.bf16.msra.mxu0 %v2660
        %2681 = vmatmul.bf16.gmra.mxu0 %v2671
        %v2682 = vpop.f32.mrf.mxu0
        %v2683 = vadd.f32 0.0, %v2682
        %v2684 = vpop.f32.mrf.mxu0
        %2685 = vdwg.mxu0
        %v2686 = vadd.f32 %v2627, %v2683
        %v2687 = vld [vmem:[#allocation7] sm:$0x1]
        %v2688 = vadd.f32 %v2686, %v2687
        %v2689 = vmax.f32 %v2688, 0.0
        %v2690 = vld [vmem:[%s15] sm:$0xf]
        %v2691 = vld [vmem:[%s15 + $0x4] sm:$0xf]
        %v2692 = vld [vmem:[%s15 + $0x8] sm:$0xf]
        %v2693 = vld [vmem:[%s15 + $0xc] sm:$0xf]
        %v2694 = vld [vmem:[%s15 + $0x10] sm:$0xf]
        %v2695 = vld [vmem:[%s15 + $0x14] sm:$0xf]
        %v2696 = vld [vmem:[%s15 + $0x18] sm:$0xf]
        %v2697 = vld [vmem:[%s15 + $0x1c] sm:$0xf]
        %v2698 = vld [vmem:[%s15 + $0x20] sm:$0xf]
        %v2699 = vld [vmem:[%s15 + $0x24] sm:$0xf]
        %v2700 = vld [vmem:[%s15 + $0x28] sm:$0xf]
        %v2701 = vld [vmem:[%s15 + $0x2c] sm:$0xf]
        %v2702 = vld [vmem:[%s15 + $0x30] sm:$0xf]
        %v2703 = vld [vmem:[%s15 + $0x34] sm:$0xf]
        %v2704 = vld [vmem:[%s15 + $0x38] sm:$0xf]
        %v2705 = vld [vmem:[%s15 + $0x3c] sm:$0xf]
        %v2706 = vpack.c.bf16 %v2689, %v2689
        %v2707 = vld [vmem:[#allocation8] sm:$0x1]
        %v2724 = vunpack.c.l.b16 %v2690
        %v2725 = vunpack.c.l.b16 %v2691
        %v2726 = vunpack.c.l.b16 %v2692
        %v2727 = vunpack.c.l.b16 %v2693
        %v2728 = vunpack.c.l.b16 %v2694
        %v2729 = vunpack.c.l.b16 %v2695
        %v2730 = vunpack.c.l.b16 %v2696
        %v2731 = vunpack.c.l.b16 %v2697
        %v2732 = vunpack.c.l.b16 %v2698
        %v2733 = vunpack.c.l.b16 %v2699
        %v2734 = vunpack.c.l.b16 %v2700
        %v2735 = vunpack.c.l.b16 %v2701
        %v2736 = vunpack.c.l.b16 %v2702
        %v2737 = vunpack.c.l.b16 %v2703
        %v2738 = vunpack.c.l.b16 %v2704
        %v2739 = vunpack.c.l.b16 %v2705
        %v2740 = vpack.c.b16 %v2725, %v2724
        %v2741 = vpack.c.b16 %v2727, %v2726
        %v2742 = vpack.c.b16 %v2729, %v2728
        %v2743 = vpack.c.b16 %v2731, %v2730
        %v2744 = vpack.c.b16 %v2733, %v2732
        %v2745 = vpack.c.b16 %v2735, %v2734
        %v2746 = vpack.c.b16 %v2737, %v2736
        %v2747 = vpack.c.b16 %v2739, %v2738
        %2756 = vmatpush.bf16.msra.mxu0 %v2747
        %2757 = vmatpush.bf16.msra.mxu0 %v2746
        %2758 = vmatpush.bf16.msra.mxu0 %v2745
        %2759 = vmatpush.bf16.msra.mxu0 %v2744
        %2760 = vmatpush.bf16.msra.mxu0 %v2743
        %2761 = vmatpush.bf16.msra.mxu0 %v2742
        %2762 = vmatpush.bf16.msra.mxu0 %v2741
        %2763 = vmatpush.bf16.msra.mxu0 %v2740
        %2764 = vmatmul.bf16.gmra.mxu0 %v2706
        %v2765 = vpop.f32.mrf.mxu0
        %v2766 = vadd.f32 %v2707, %v2765
        %v2767 = vpop.f32.mrf.mxu0
        %2768 = vdwg.mxu0
        %v2769 = vmax.f32 %v2766, 0.0
        %v2770 = vld [vmem:[%s17] sm:$0xf]
        %v2771 = vld [vmem:[%s17 + $0x4] sm:$0xf]
        %v2772 = vld [vmem:[%s17 + $0x8] sm:$0xf]
        %v2773 = vld [vmem:[%s17 + $0xc] sm:$0xf]
        %v2774 = vld [vmem:[%s17 + $0x10] sm:$0xf]
        %v2775 = vld [vmem:[%s17 + $0x14] sm:$0xf]
        %v2776 = vld [vmem:[%s17 + $0x18] sm:$0xf]
        %v2777 = vld [vmem:[%s17 + $0x1c] sm:$0xf]
        %v2778 = vld [vmem:[%s17 + $0x20] sm:$0xf]
        %v2779 = vld [vmem:[%s17 + $0x24] sm:$0xf]
        %v2780 = vld [vmem:[%s17 + $0x28] sm:$0xf]
        %v2781 = vld [vmem:[%s17 + $0x2c] sm:$0xf]
        %v2782 = vld [vmem:[%s17 + $0x30] sm:$0xf]
        %v2783 = vld [vmem:[%s17 + $0x34] sm:$0xf]
        %v2784 = vld [vmem:[%s17 + $0x38] sm:$0xf]
        %v2785 = vld [vmem:[%s17 + $0x3c] sm:$0xf]
        %v2786 = vpack.c.bf16 %v2769, %v2769
        %v2787 = vld [vmem:[#allocation10] sm:$0x1]
        %v2804 = vunpack.c.l.b16 %v2770
        %v2805 = vunpack.c.l.b16 %v2771
        %v2806 = vunpack.c.l.b16 %v2772
        %v2807 = vunpack.c.l.b16 %v2773
        %v2808 = vunpack.c.l.b16 %v2774
        %v2809 = vunpack.c.l.b16 %v2775
        %v2810 = vunpack.c.l.b16 %v2776
        %v2811 = vunpack.c.l.b16 %v2777
        %v2812 = vunpack.c.l.b16 %v2778
        %v2813 = vunpack.c.l.b16 %v2779
        %v2814 = vunpack.c.l.b16 %v2780
        %v2815 = vunpack.c.l.b16 %v2781
        %v2816 = vunpack.c.l.b16 %v2782
        %v2817 = vunpack.c.l.b16 %v2783
        %v2818 = vunpack.c.l.b16 %v2784
        %v2819 = vunpack.c.l.b16 %v2785
        %v2820 = vpack.c.b16 %v2805, %v2804
        %v2821 = vpack.c.b16 %v2807, %v2806
        %v2822 = vpack.c.b16 %v2809, %v2808
        %v2823 = vpack.c.b16 %v2811, %v2810
        %v2824 = vpack.c.b16 %v2813, %v2812
        %v2825 = vpack.c.b16 %v2815, %v2814
        %v2826 = vpack.c.b16 %v2817, %v2816
        %v2827 = vpack.c.b16 %v2819, %v2818
        %2836 = vmatpush.bf16.msra.mxu0 %v2827
        %2837 = vmatpush.bf16.msra.mxu0 %v2826
        %2838 = vmatpush.bf16.msra.mxu0 %v2825
        %2839 = vmatpush.bf16.msra.mxu0 %v2824
        %2840 = vmatpush.bf16.msra.mxu0 %v2823
        %2841 = vmatpush.bf16.msra.mxu0 %v2822
        %2842 = vmatpush.bf16.msra.mxu0 %v2821
        %2843 = vmatpush.bf16.msra.mxu0 %v2820
        %2844 = vmatmul.bf16.gmra.mxu0 %v2786
        %v2845 = vpop.f32.mrf.mxu0
        %v2846 = vadd.f32 %v2787, %v2845
        %v2847 = vpop.f32.mrf.mxu0
        %2848 = vdwg.mxu0
        %2849 = vst [vmem:[%s667] sm:$0x1] %v2846
        %s2850 = sand.u32 %s448, 1
        %s2851 = scalar_lea.sflag [#allocation4], %s2850
        %s2852 = sand.u32 %s448, 1
        %s2853 = scalar_lea.vmem [#allocation11], %s2852
        // Predicated region
        $region117: #{net_forward.1} parent=95 // pred_check
          %p2854 = pneg %p458
        $region118: #{net_forward.1} parent=95 // pred_check_branch
          %2856 = sbr.rel (%p2854) target = $region120
        $region119: #{net_forward.1} parent=95 // pred_region
          %2858 = vsyncadd %s2851, 0
          %s2859 = scalar_lea.hbm %s19, %s36
          %s2861 = sshll.u32 %s2853, 4
          %s2862 = int_to_ptr.vmem [resolvable:$true] %s2861
          %s2863 = sshll.u32 %s2859, 4
          %s2864 = int_to_ptr.hbm [resolvable:$true] %s2863
          %2866 = dma.vmem_to_hbm [thread:$0]  %s2862, 16, %s2864, %s2851
        $region120: #{net_forward.1} parent=95 // pred_fallthru
          _
      $region96: #{net_forward.1} parent=5 // pred_fallthru
        _
      %p2867 = scmp.le.s32.totalorder 2, %s31
      // Predicated region
      $region121: #{net_forward.1} parent=5 // pred_check
        %p2868 = pneg %p2867
      $region122: #{net_forward.1} parent=5 // pred_check_branch
        %2870 = sbr.rel (%p2868) target = $region124
      $region123: #{net_forward.1} parent=5 // pred_region
        %s2871 = ssub.s32 %s31, 2
        // Predicated region
        $region125: #{net_forward.1} parent=123 // pred_check
          %p2872 = pneg %p464
        $region126: #{net_forward.1} parent=123 // pred_check_branch
          %2874 = sbr.rel (%p2872) target = $region128
        $region127: #{net_forward.1} parent=123 // pred_region
          %s2875 = sand.u32 %s449, 1
          %s2876 = scalar_lea.sflag [#allocation4], %s2875
          %s2877 = sand.u32 %s449, 1
          %s2878 = scalar_lea.vmem [#allocation11], %s2877
          %2880 = dma.done %s2876, 16
        $region128: #{net_forward.1} parent=123 // pred_fallthru
          _
      $region124: #{net_forward.1} parent=5 // pred_fallthru
        _
    $region6: #{net_forward.1} parent=1 // loop_footer
      %s35 = sadd.s32 1, %s31
    $region7: #{net_forward.1} parent=1 // loop_footer_branch
      %30 = sbr.rel target = $region3
    $region8: #{net_forward.1} parent=1 // loop_exit
      _
    %2881 = vsyncpa [#allocation3], 1
    %s2882 = scalar_lea.sflag [#allocation3], 1
    %2883 = vsyncpa %s2882, 1
    %2884 = vsyncpa [#allocation6], 1
    %2885 = vsyncpa [#allocation9], 1
    %2886 = vsyncpa [#allocation4], 1
    %s2887 = scalar_lea.sflag [#allocation4], 1
    %2888 = vsyncpa %s2887, 1

</llo_original>
